<compile_context>
chip_gen: v6e
topology: v6e:2x2x1
jax: 0.10.0
libtpu: 0.0.40
codegen_flags: <defaults>
</compile_context>

<pallas_src>
import functools

import jax
import jax.numpy as jnp
from jax.experimental import pallas as pl
from jax.experimental.pallas import tpu as pltpu


def _gated_mha_kernel(q_ref, k_ref, v_ref,
                      wq_ref, wk_ref, wv_ref, wo_ref, wg_ref, bg_ref,
                      out_ref, *, num_heads):
    TB, QL, QD = q_ref.shape
    _, KL, KD = k_ref.shape
    _, VL, VD = v_ref.shape
    H = wq_ref.shape[1]
    hd = H // num_heads
    scale = 1.0 / (hd ** 0.5)
    bf16 = jnp.bfloat16

    # Flatten (batch, seq) rows -> 2-D MXU matmuls, f32 accumulation.
    q2 = q_ref[...].reshape(TB * QL, QD)                       # bf16
    k2 = k_ref[...].reshape(TB * KL, KD)
    v2 = v_ref[...].reshape(TB * VL, VD)

    hq = jnp.dot(q2, wq_ref[...], preferred_element_type=jnp.float32)
    hk = jnp.dot(k2, wk_ref[...], preferred_element_type=jnp.float32)
    hv = jnp.dot(v2, wv_ref[...], preferred_element_type=jnp.float32)
    # Single bf16 cast of the full projections (instead of per-head casts).
    hq = hq.astype(bf16).reshape(TB, QL, H)
    hk = hk.astype(bf16).reshape(TB, KL, H)
    hv = hv.astype(bf16).reshape(TB, VL, H)

    # Per-head scaled-dot-product attention; softmax over the key axis.
    head_outs = []
    for h in range(num_heads):
        sl = slice(h * hd, (h + 1) * hd)
        qh = hq[:, :, sl]
        kh = hk[:, :, sl]
        vh = hv[:, :, sl]
        s = jnp.einsum("bqd,bkd->bqk", qh, kh,
                       preferred_element_type=jnp.float32) * scale
        # TODO(synk): attn_mask masked_fill (score -> -1e30) would go here.
        s = s - jnp.max(s, axis=-1, keepdims=True)
        p = jnp.exp(s)
        p = p * pl.reciprocal(jnp.sum(p, axis=-1, keepdims=True), approx=True)
        oh = jnp.einsum("bqk,bkd->bqd", p.astype(bf16), vh,
                        preferred_element_type=jnp.float32)     # (TB, QL, hd)
        head_outs.append(oh)
    attn_vec = jnp.concatenate(head_outs, axis=-1)               # (TB, QL, H) f32

    # Output projection o_net (bias-free).
    attn_out = jnp.dot(attn_vec.reshape(TB * QL, H).astype(bf16),
                       wo_ref[...], preferred_element_type=jnp.float32)

    # Gate: sigmoid(cat([query, attn_out]) @ Wg + bg) -- single K=2*QD matmul.
    # Concat done in bf16 (half the lane traffic of an f32 concat).
    gin = jnp.concatenate([q2, attn_out.astype(bf16)], axis=-1)
    gate = jax.nn.sigmoid(
        jnp.dot(gin, wg_ref[...], preferred_element_type=jnp.float32)
        + bg_ref[...])

    # gate*q + (1-gate)*attn_out == attn_out + gate*(q - attn_out): one FMA form.
    q2f = q2.astype(jnp.float32)
    out = attn_out + gate * (q2f - attn_out)
    out_ref[...] = out.reshape(TB, QL, QD).astype(out_ref.dtype)


def _largest_divisor_le(n, cap):
    for d in range(min(n, cap), 0, -1):
        if n % d == 0:
            return d
    return 1


def gated_multi_head_attn(query, key, value, params, *, num_heads, tile_b=8):
    """query: (B, qlen, qdim); key: (B, klen, kdim); value: (B, klen, vdim).
    Returns f32 (B, qlen, qdim)."""
    B, QL, QD = query.shape
    _, KL, KD = key.shape
    _, VL, VD = value.shape
    assert VL == KL, "key/value lengths must match"
    H = params["wq"].shape[1]
    assert H % num_heads == 0

    TB = _largest_divisor_le(B, tile_b)
    grid = (B // TB,)

    bf16 = jnp.bfloat16
    args = (
        query.astype(bf16), key.astype(bf16), value.astype(bf16),
        params["wq"].astype(bf16), params["wk"].astype(bf16),
        params["wv"].astype(bf16), params["wo"].astype(bf16),
        params["wg"].astype(bf16), params["bg"].astype(jnp.float32),
    )

    def batch_spec(L, D):
        return pl.BlockSpec((TB, L, D), lambda b: (b, 0, 0))

    def resident_spec(shape):
        # Constant block index -> fetched once, stays VMEM-resident across grid.
        return pl.BlockSpec(shape, lambda b: (0,) * len(shape))

    in_specs = [
        batch_spec(QL, QD), batch_spec(KL, KD), batch_spec(VL, VD),
        resident_spec(params["wq"].shape), resident_spec(params["wk"].shape),
        resident_spec(params["wv"].shape), resident_spec(params["wo"].shape),
        resident_spec(params["wg"].shape), resident_spec(params["bg"].shape),
    ]
    out_specs = pl.BlockSpec((TB, QL, QD), lambda b: (b, 0, 0))

    # Advisory cost estimate for XLA's scheduler.
    flops = 2 * B * (QL * QD * H + KL * KD * H + VL * VD * H
                     + 2 * QL * KL * H + QL * H * QD + QL * 2 * QD * QD)
    transcendentals = B * num_heads * QL * KL + B * QL * QD
    bytes_accessed = (2 * B * (QL * QD + KL * KD + VL * VD)            # bf16 in
                      + 2 * (QD * H + KD * H + VD * H + H * QD + 2 * QD * QD)
                      + 4 * QD                                         # f32 bias
                      + 4 * B * QL * QD)                               # f32 out

    return pl.pallas_call(
        functools.partial(_gated_mha_kernel, num_heads=num_heads),
        out_shape=jax.ShapeDtypeStruct((B, QL, QD), jnp.float32),
        grid=grid,
        in_specs=in_specs,
        out_specs=out_specs,
        compiler_params=pltpu.CompilerParams(
            dimension_semantics=("parallel",),
            vmem_limit_bytes=32 * 1024 * 1024),
        cost_estimate=pl.CostEstimate(
            flops=flops, transcendentals=transcendentals,
            bytes_accessed=bytes_accessed),
    )(*args)


def init_params(key, query_dim, key_dim, value_dim, hidden_dim, num_heads):
    """Matches the module init: normal(0, 1/sqrt(head_dim)) weights (stored
    transposed as (in, out)), g_net bias = ones."""
    head_dim = hidden_dim // num_heads
    std = 1.0 / (head_dim ** 0.5)
    ks = jax.random.split(key, 5)
    return {
        "wq": jax.random.normal(ks[0], (query_dim, hidden_dim), jnp.float32) * std,
        "wk": jax.random.normal(ks[1], (key_dim, hidden_dim), jnp.float32) * std,
        "wv": jax.random.normal(ks[2], (value_dim, hidden_dim), jnp.float32) * std,
        "wo": jax.random.normal(ks[3], (hidden_dim, query_dim), jnp.float32) * std,
        "wg": jax.random.normal(ks[4], (2 * query_dim, query_dim), jnp.float32) * std,
        "bg": jnp.ones((1, query_dim), jnp.float32),
    }


def _reference(query, key, value, params, num_heads):
    """Pure-JAX f32 reference of the module's forward (attn_mask=None)."""
    H = params["wq"].shape[1]
    hd = H // num_heads
    scale = 1.0 / (hd ** 0.5)
    B, QL, _ = query.shape
    KL = key.shape[1]
    hq = (query @ params["wq"]).reshape(B, QL, num_heads, hd)
    hk = (key @ params["wk"]).reshape(B, KL, num_heads, hd)
    hv = (value @ params["wv"]).reshape(B, KL, num_heads, hd)
    s = jnp.einsum("bind,bjnd->bijn", hq, hk) * scale
    p = jax.nn.softmax(s, axis=2)
    attn_vec = jnp.einsum("bijn,bjnd->bind", p, hv).reshape(B, QL, H)
    attn_out = attn_vec @ params["wo"]
    gate = jax.nn.sigmoid(
        jnp.concatenate([query, attn_out], axis=-1) @ params["wg"] + params["bg"])
    return gate * query + (1.0 - gate) * attn_out


if __name__ == "__main__":
    B, QLEN, KLEN = 2, 8, 8
    QUERY_DIM = KEY_DIM = VALUE_DIM = 16
    HIDDEN_DIM, NUM_HEADS = 32, 4

    root = jax.random.PRNGKey(0)
    kq, kk, kv, kp = jax.random.split(root, 4)
    query = jax.random.normal(kq, (B, QLEN, QUERY_DIM), jnp.float32)
    key = jax.random.normal(kk, (B, KLEN, KEY_DIM), jnp.float32)
    value = jax.random.normal(kv, (B, KLEN, VALUE_DIM), jnp.float32)

    params = init_params(kp, QUERY_DIM, KEY_DIM, VALUE_DIM, HIDDEN_DIM, NUM_HEADS)

    # tile_b=1 -> grid of 2 steps; exercises the batch grid + parallel semantics.
    out = gated_multi_head_attn(query, key, value, params,
                                num_heads=NUM_HEADS, tile_b=1)
    out = jax.block_until_ready(out)
    assert out.shape == (B, QLEN, QUERY_DIM) and out.dtype == jnp.float32

    ref = _reference(query, key, value, params, NUM_HEADS)
    err = float(jnp.max(jnp.abs(out - ref)))
    assert err < 0.25, f"kernel/reference mismatch: max abs err {err}"
    print("KERNEL_OK")
</pallas_src>

<mosaic_0001>
module attributes {stable_mosaic.version = 11 : i64} {
  func.func @_gated_mha_kernel(%arg0: i32, %arg1: memref<1x8x16xbf16, #tpu.memory_space<vmem>>, %arg2: memref<1x8x16xbf16, #tpu.memory_space<vmem>>, %arg3: memref<1x8x16xbf16, #tpu.memory_space<vmem>>, %arg4: memref<16x32xbf16, #tpu.memory_space<vmem>>, %arg5: memref<16x32xbf16, #tpu.memory_space<vmem>>, %arg6: memref<16x32xbf16, #tpu.memory_space<vmem>>, %arg7: memref<32x16xbf16, #tpu.memory_space<vmem>>, %arg8: memref<32x16xbf16, #tpu.memory_space<vmem>>, %arg9: memref<1x16xf32, #tpu.memory_space<vmem>>, %arg10: memref<1x8x16xf32, #tpu.memory_space<vmem>>) attributes {dimension_semantics = [#tpu.dimension_semantics<parallel>], iteration_bounds = array<i64: 2>, scalar_prefetch = 0 : i64, scratch_operands = 0 : i64, tpu.core_type = #tpu.core_type<tc>, window_params = [{transform_indices = @transform_0, window_bounds = array<i64: 1, 8, 16>}, {transform_indices = @transform_1, window_bounds = array<i64: 1, 8, 16>}, {transform_indices = @transform_2, window_bounds = array<i64: 1, 8, 16>}, {pipeline_mode = #tpu.pipeline_mode<synchronous>, transform_indices = @transform_3, window_bounds = array<i64: 16, 32>}, {pipeline_mode = #tpu.pipeline_mode<synchronous>, transform_indices = @transform_4, window_bounds = array<i64: 16, 32>}, {pipeline_mode = #tpu.pipeline_mode<synchronous>, transform_indices = @transform_5, window_bounds = array<i64: 16, 32>}, {pipeline_mode = #tpu.pipeline_mode<synchronous>, transform_indices = @transform_6, window_bounds = array<i64: 32, 16>}, {pipeline_mode = #tpu.pipeline_mode<synchronous>, transform_indices = @transform_7, window_bounds = array<i64: 32, 16>}, {pipeline_mode = #tpu.pipeline_mode<synchronous>, transform_indices = @transform_8, window_bounds = array<i64: 1, 16>}, {transform_indices = @transform_9, window_bounds = array<i64: 1, 8, 16>}]} {
    %c0 = arith.constant 0 : index
    %c0_0 = arith.constant 0 : index
    %c0_1 = arith.constant 0 : index
    %0 = vector.load %arg1[%c0, %c0_0, %c0_1] : memref<1x8x16xbf16, #tpu.memory_space<vmem>>, vector<1x8x16xbf16>
    %1 = vector.shape_cast %0 : vector<1x8x16xbf16> to vector<8x16xbf16>
    %c0_2 = arith.constant 0 : index
    %c0_3 = arith.constant 0 : index
    %c0_4 = arith.constant 0 : index
    %2 = vector.load %arg2[%c0_2, %c0_3, %c0_4] : memref<1x8x16xbf16, #tpu.memory_space<vmem>>, vector<1x8x16xbf16>
    %3 = vector.shape_cast %2 : vector<1x8x16xbf16> to vector<8x16xbf16>
    %c0_5 = arith.constant 0 : index
    %c0_6 = arith.constant 0 : index
    %c0_7 = arith.constant 0 : index
    %4 = vector.load %arg3[%c0_5, %c0_6, %c0_7] : memref<1x8x16xbf16, #tpu.memory_space<vmem>>, vector<1x8x16xbf16>
    %5 = vector.shape_cast %4 : vector<1x8x16xbf16> to vector<8x16xbf16>
    %c0_8 = arith.constant 0 : index
    %c0_9 = arith.constant 0 : index
    %6 = vector.load %arg4[%c0_8, %c0_9] : memref<16x32xbf16, #tpu.memory_space<vmem>>, vector<16x32xbf16>
    %cst = arith.constant dense<0.000000e+00> : vector<8x32xf32>
    %7 = tpu.matmul %1, %6, %cst {dimension_numbers = #tpu.dot_dimension_numbers<[1], [0], [0], [1], [0, 0, 1, 1], [], []>} : vector<8x16xbf16>, vector<16x32xbf16>, vector<8x32xf32> -> vector<8x32xf32>
    %c0_10 = arith.constant 0 : index
    %c0_11 = arith.constant 0 : index
    %8 = vector.load %arg5[%c0_10, %c0_11] : memref<16x32xbf16, #tpu.memory_space<vmem>>, vector<16x32xbf16>
    %cst_12 = arith.constant dense<0.000000e+00> : vector<8x32xf32>
    %9 = tpu.matmul %3, %8, %cst_12 {dimension_numbers = #tpu.dot_dimension_numbers<[1], [0], [0], [1], [0, 0, 1, 1], [], []>} : vector<8x16xbf16>, vector<16x32xbf16>, vector<8x32xf32> -> vector<8x32xf32>
    %c0_13 = arith.constant 0 : index
    %c0_14 = arith.constant 0 : index
    %10 = vector.load %arg6[%c0_13, %c0_14] : memref<16x32xbf16, #tpu.memory_space<vmem>>, vector<16x32xbf16>
    %cst_15 = arith.constant dense<0.000000e+00> : vector<8x32xf32>
    %11 = tpu.matmul %5, %10, %cst_15 {dimension_numbers = #tpu.dot_dimension_numbers<[1], [0], [0], [1], [0, 0, 1, 1], [], []>} : vector<8x16xbf16>, vector<16x32xbf16>, vector<8x32xf32> -> vector<8x32xf32>
    %12 = arith.truncf %7 : vector<8x32xf32> to vector<8x32xbf16>
    %13 = vector.shape_cast %12 : vector<8x32xbf16> to vector<1x8x32xbf16>
    %14 = arith.truncf %9 : vector<8x32xf32> to vector<8x32xbf16>
    %15 = vector.shape_cast %14 : vector<8x32xbf16> to vector<1x8x32xbf16>
    %16 = arith.truncf %11 : vector<8x32xf32> to vector<8x32xbf16>
    %17 = vector.shape_cast %16 : vector<8x32xbf16> to vector<1x8x32xbf16>
    %18 = vector.extract_strided_slice %13 {offsets = [0, 0, 0], sizes = [1, 8, 8], strides = [1, 1, 1]} : vector<1x8x32xbf16> to vector<1x8x8xbf16>
    %19 = vector.extract_strided_slice %15 {offsets = [0, 0, 0], sizes = [1, 8, 8], strides = [1, 1, 1]} : vector<1x8x32xbf16> to vector<1x8x8xbf16>
    %20 = vector.extract_strided_slice %17 {offsets = [0, 0, 0], sizes = [1, 8, 8], strides = [1, 1, 1]} : vector<1x8x32xbf16> to vector<1x8x8xbf16>
    "tpu.trace_start"() <{level = 10 : i32, message = "bqd,bkd->bqk"}> : () -> ()
    %cst_16 = arith.constant dense<0.000000e+00> : vector<1x8x8xf32>
    %21 = tpu.matmul %18, %19, %cst_16 {dimension_numbers = #tpu.dot_dimension_numbers<[2], [2], [1], [1], [0, 0, 0, 1, 1, 1], [0], [0]>} : vector<1x8x8xbf16>, vector<1x8x8xbf16>, vector<1x8x8xf32> -> vector<1x8x8xf32>
    "tpu.trace_stop"() : () -> ()
    %cst_17 = arith.constant 0.353553385 : f32
    %22 = vector.broadcast %cst_17 : f32 to vector<1x8x8xf32>
    %23 = arith.mulf %21, %22 : vector<1x8x8xf32>
    %cst_18 = arith.constant dense<0xFF800000> : vector<1x8xf32>
    %24 = vector.multi_reduction <maximumf>, %23, %cst_18 [2] : vector<1x8x8xf32> to vector<1x8xf32>
    %25 = vector.shape_cast %24 : vector<1x8xf32> to vector<1x8x1xf32>
    %26 = vector.broadcast %25 : vector<1x8x1xf32> to vector<1x8x8xf32>
    %27 = arith.subf %23, %26 : vector<1x8x8xf32>
    %28 = math.exp %27 : vector<1x8x8xf32>
    %cst_19 = arith.constant dense<0.000000e+00> : vector<1x8xf32>
    %29 = vector.multi_reduction <add>, %28, %cst_19 [2] : vector<1x8x8xf32> to vector<1x8xf32>
    %30 = vector.shape_cast %29 : vector<1x8xf32> to vector<1x8x1xf32>
    %31 = tpu.reciprocal %30 {approx = true} : vector<1x8x1xf32> -> vector<1x8x1xf32>
    %32 = vector.broadcast %31 : vector<1x8x1xf32> to vector<1x8x8xf32>
    %33 = arith.mulf %28, %32 : vector<1x8x8xf32>
    %34 = arith.truncf %33 : vector<1x8x8xf32> to vector<1x8x8xbf16>
    "tpu.trace_start"() <{level = 10 : i32, message = "bqk,bkd->bqd"}> : () -> ()
    %cst_20 = arith.constant dense<0.000000e+00> : vector<1x8x8xf32>
    %35 = tpu.matmul %34, %20, %cst_20 {dimension_numbers = #tpu.dot_dimension_numbers<[2], [1], [1], [2], [0, 0, 0, 1, 1, 2], [0], [0]>} : vector<1x8x8xbf16>, vector<1x8x8xbf16>, vector<1x8x8xf32> -> vector<1x8x8xf32>
    "tpu.trace_stop"() : () -> ()
    %36 = vector.extract_strided_slice %13 {offsets = [0, 0, 8], sizes = [1, 8, 8], strides = [1, 1, 1]} : vector<1x8x32xbf16> to vector<1x8x8xbf16>
    %37 = vector.extract_strided_slice %15 {offsets = [0, 0, 8], sizes = [1, 8, 8], strides = [1, 1, 1]} : vector<1x8x32xbf16> to vector<1x8x8xbf16>
    %38 = vector.extract_strided_slice %17 {offsets = [0, 0, 8], sizes = [1, 8, 8], strides = [1, 1, 1]} : vector<1x8x32xbf16> to vector<1x8x8xbf16>
    "tpu.trace_start"() <{level = 10 : i32, message = "bqd,bkd->bqk"}> : () -> ()
    %cst_21 = arith.constant dense<0.000000e+00> : vector<1x8x8xf32>
    %39 = tpu.matmul %36, %37, %cst_21 {dimension_numbers = #tpu.dot_dimension_numbers<[2], [2], [1], [1], [0, 0, 0, 1, 1, 1], [0], [0]>} : vector<1x8x8xbf16>, vector<1x8x8xbf16>, vector<1x8x8xf32> -> vector<1x8x8xf32>
    "tpu.trace_stop"() : () -> ()
    %cst_22 = arith.constant 0.353553385 : f32
    %40 = vector.broadcast %cst_22 : f32 to vector<1x8x8xf32>
    %41 = arith.mulf %39, %40 : vector<1x8x8xf32>
    %cst_23 = arith.constant dense<0xFF800000> : vector<1x8xf32>
    %42 = vector.multi_reduction <maximumf>, %41, %cst_23 [2] : vector<1x8x8xf32> to vector<1x8xf32>
    %43 = vector.shape_cast %42 : vector<1x8xf32> to vector<1x8x1xf32>
    %44 = vector.broadcast %43 : vector<1x8x1xf32> to vector<1x8x8xf32>
    %45 = arith.subf %41, %44 : vector<1x8x8xf32>
    %46 = math.exp %45 : vector<1x8x8xf32>
    %cst_24 = arith.constant dense<0.000000e+00> : vector<1x8xf32>
    %47 = vector.multi_reduction <add>, %46, %cst_24 [2] : vector<1x8x8xf32> to vector<1x8xf32>
    %48 = vector.shape_cast %47 : vector<1x8xf32> to vector<1x8x1xf32>
    %49 = tpu.reciprocal %48 {approx = true} : vector<1x8x1xf32> -> vector<1x8x1xf32>
    %50 = vector.broadcast %49 : vector<1x8x1xf32> to vector<1x8x8xf32>
    %51 = arith.mulf %46, %50 : vector<1x8x8xf32>
    %52 = arith.truncf %51 : vector<1x8x8xf32> to vector<1x8x8xbf16>
    "tpu.trace_start"() <{level = 10 : i32, message = "bqk,bkd->bqd"}> : () -> ()
    %cst_25 = arith.constant dense<0.000000e+00> : vector<1x8x8xf32>
    %53 = tpu.matmul %52, %38, %cst_25 {dimension_numbers = #tpu.dot_dimension_numbers<[2], [1], [1], [2], [0, 0, 0, 1, 1, 2], [0], [0]>} : vector<1x8x8xbf16>, vector<1x8x8xbf16>, vector<1x8x8xf32> -> vector<1x8x8xf32>
    "tpu.trace_stop"() : () -> ()
    %54 = vector.extract_strided_slice %13 {offsets = [0, 0, 16], sizes = [1, 8, 8], strides = [1, 1, 1]} : vector<1x8x32xbf16> to vector<1x8x8xbf16>
    %55 = vector.extract_strided_slice %15 {offsets = [0, 0, 16], sizes = [1, 8, 8], strides = [1, 1, 1]} : vector<1x8x32xbf16> to vector<1x8x8xbf16>
    %56 = vector.extract_strided_slice %17 {offsets = [0, 0, 16], sizes = [1, 8, 8], strides = [1, 1, 1]} : vector<1x8x32xbf16> to vector<1x8x8xbf16>
    "tpu.trace_start"() <{level = 10 : i32, message = "bqd,bkd->bqk"}> : () -> ()
    %cst_26 = arith.constant dense<0.000000e+00> : vector<1x8x8xf32>
    %57 = tpu.matmul %54, %55, %cst_26 {dimension_numbers = #tpu.dot_dimension_numbers<[2], [2], [1], [1], [0, 0, 0, 1, 1, 1], [0], [0]>} : vector<1x8x8xbf16>, vector<1x8x8xbf16>, vector<1x8x8xf32> -> vector<1x8x8xf32>
    "tpu.trace_stop"() : () -> ()
    %cst_27 = arith.constant 0.353553385 : f32
    %58 = vector.broadcast %cst_27 : f32 to vector<1x8x8xf32>
    %59 = arith.mulf %57, %58 : vector<1x8x8xf32>
    %cst_28 = arith.constant dense<0xFF800000> : vector<1x8xf32>
    %60 = vector.multi_reduction <maximumf>, %59, %cst_28 [2] : vector<1x8x8xf32> to vector<1x8xf32>
    %61 = vector.shape_cast %60 : vector<1x8xf32> to vector<1x8x1xf32>
    %62 = vector.broadcast %61 : vector<1x8x1xf32> to vector<1x8x8xf32>
    %63 = arith.subf %59, %62 : vector<1x8x8xf32>
    %64 = math.exp %63 : vector<1x8x8xf32>
    %cst_29 = arith.constant dense<0.000000e+00> : vector<1x8xf32>
    %65 = vector.multi_reduction <add>, %64, %cst_29 [2] : vector<1x8x8xf32> to vector<1x8xf32>
    %66 = vector.shape_cast %65 : vector<1x8xf32> to vector<1x8x1xf32>
    %67 = tpu.reciprocal %66 {approx = true} : vector<1x8x1xf32> -> vector<1x8x1xf32>
    %68 = vector.broadcast %67 : vector<1x8x1xf32> to vector<1x8x8xf32>
    %69 = arith.mulf %64, %68 : vector<1x8x8xf32>
    %70 = arith.truncf %69 : vector<1x8x8xf32> to vector<1x8x8xbf16>
    "tpu.trace_start"() <{level = 10 : i32, message = "bqk,bkd->bqd"}> : () -> ()
    %cst_30 = arith.constant dense<0.000000e+00> : vector<1x8x8xf32>
    %71 = tpu.matmul %70, %56, %cst_30 {dimension_numbers = #tpu.dot_dimension_numbers<[2], [1], [1], [2], [0, 0, 0, 1, 1, 2], [0], [0]>} : vector<1x8x8xbf16>, vector<1x8x8xbf16>, vector<1x8x8xf32> -> vector<1x8x8xf32>
    "tpu.trace_stop"() : () -> ()
    %72 = vector.extract_strided_slice %13 {offsets = [0, 0, 24], sizes = [1, 8, 8], strides = [1, 1, 1]} : vector<1x8x32xbf16> to vector<1x8x8xbf16>
    %73 = vector.extract_strided_slice %15 {offsets = [0, 0, 24], sizes = [1, 8, 8], strides = [1, 1, 1]} : vector<1x8x32xbf16> to vector<1x8x8xbf16>
    %74 = vector.extract_strided_slice %17 {offsets = [0, 0, 24], sizes = [1, 8, 8], strides = [1, 1, 1]} : vector<1x8x32xbf16> to vector<1x8x8xbf16>
    "tpu.trace_start"() <{level = 10 : i32, message = "bqd,bkd->bqk"}> : () -> ()
    %cst_31 = arith.constant dense<0.000000e+00> : vector<1x8x8xf32>
    %75 = tpu.matmul %72, %73, %cst_31 {dimension_numbers = #tpu.dot_dimension_numbers<[2], [2], [1], [1], [0, 0, 0, 1, 1, 1], [0], [0]>} : vector<1x8x8xbf16>, vector<1x8x8xbf16>, vector<1x8x8xf32> -> vector<1x8x8xf32>
    "tpu.trace_stop"() : () -> ()
    %cst_32 = arith.constant 0.353553385 : f32
    %76 = vector.broadcast %cst_32 : f32 to vector<1x8x8xf32>
    %77 = arith.mulf %75, %76 : vector<1x8x8xf32>
    %cst_33 = arith.constant dense<0xFF800000> : vector<1x8xf32>
    %78 = vector.multi_reduction <maximumf>, %77, %cst_33 [2] : vector<1x8x8xf32> to vector<1x8xf32>
    %79 = vector.shape_cast %78 : vector<1x8xf32> to vector<1x8x1xf32>
    %80 = vector.broadcast %79 : vector<1x8x1xf32> to vector<1x8x8xf32>
    %81 = arith.subf %77, %80 : vector<1x8x8xf32>
    %82 = math.exp %81 : vector<1x8x8xf32>
    %cst_34 = arith.constant dense<0.000000e+00> : vector<1x8xf32>
    %83 = vector.multi_reduction <add>, %82, %cst_34 [2] : vector<1x8x8xf32> to vector<1x8xf32>
    %84 = vector.shape_cast %83 : vector<1x8xf32> to vector<1x8x1xf32>
    %85 = tpu.reciprocal %84 {approx = true} : vector<1x8x1xf32> -> vector<1x8x1xf32>
    %86 = vector.broadcast %85 : vector<1x8x1xf32> to vector<1x8x8xf32>
    %87 = arith.mulf %82, %86 : vector<1x8x8xf32>
    %88 = arith.truncf %87 : vector<1x8x8xf32> to vector<1x8x8xbf16>
    "tpu.trace_start"() <{level = 10 : i32, message = "bqk,bkd->bqd"}> : () -> ()
    %cst_35 = arith.constant dense<0.000000e+00> : vector<1x8x8xf32>
    %89 = tpu.matmul %88, %74, %cst_35 {dimension_numbers = #tpu.dot_dimension_numbers<[2], [1], [1], [2], [0, 0, 0, 1, 1, 2], [0], [0]>} : vector<1x8x8xbf16>, vector<1x8x8xbf16>, vector<1x8x8xf32> -> vector<1x8x8xf32>
    "tpu.trace_stop"() : () -> ()
    %90 = tpu.concatenate %35, %53, %71, %89 in 2 : vector<1x8x8xf32>, vector<1x8x8xf32>, vector<1x8x8xf32>, vector<1x8x8xf32> -> vector<1x8x32xf32>
    %91 = vector.shape_cast %90 : vector<1x8x32xf32> to vector<8x32xf32>
    %92 = arith.truncf %91 : vector<8x32xf32> to vector<8x32xbf16>
    %c0_36 = arith.constant 0 : index
    %c0_37 = arith.constant 0 : index
    %93 = vector.load %arg7[%c0_36, %c0_37] : memref<32x16xbf16, #tpu.memory_space<vmem>>, vector<32x16xbf16>
    %cst_38 = arith.constant dense<0.000000e+00> : vector<8x16xf32>
    %94 = tpu.matmul %92, %93, %cst_38 {dimension_numbers = #tpu.dot_dimension_numbers<[1], [0], [0], [1], [0, 0, 1, 1], [], []>} : vector<8x32xbf16>, vector<32x16xbf16>, vector<8x16xf32> -> vector<8x16xf32>
    %95 = arith.truncf %94 : vector<8x16xf32> to vector<8x16xbf16>
    %96 = tpu.concatenate %1, %95 in 1 : vector<8x16xbf16>, vector<8x16xbf16> -> vector<8x32xbf16>
    %c0_39 = arith.constant 0 : index
    %c0_40 = arith.constant 0 : index
    %97 = vector.load %arg8[%c0_39, %c0_40] : memref<32x16xbf16, #tpu.memory_space<vmem>>, vector<32x16xbf16>
    %cst_41 = arith.constant dense<0.000000e+00> : vector<8x16xf32>
    %98 = tpu.matmul %96, %97, %cst_41 {dimension_numbers = #tpu.dot_dimension_numbers<[1], [0], [0], [1], [0, 0, 1, 1], [], []>} : vector<8x32xbf16>, vector<32x16xbf16>, vector<8x16xf32> -> vector<8x16xf32>
    %c0_42 = arith.constant 0 : index
    %c0_43 = arith.constant 0 : index
    %99 = vector.load %arg9[%c0_42, %c0_43] : memref<1x16xf32, #tpu.memory_space<vmem>>, vector<1x16xf32>
    %100 = vector.broadcast %99 : vector<1x16xf32> to vector<8x16xf32>
    %101 = arith.addf %98, %100 : vector<8x16xf32>
    %102 = arith.negf %101 : vector<8x16xf32>
    %103 = math.exp %102 : vector<8x16xf32>
    %cst_44 = arith.constant 1.000000e+00 : f32
    %104 = vector.broadcast %cst_44 : f32 to vector<8x16xf32>
    %105 = arith.addf %104, %103 : vector<8x16xf32>
    %106 = arith.divf %104, %105 : vector<8x16xf32>
    %107 = arith.extf %1 : vector<8x16xbf16> to vector<8x16xf32>
    %108 = arith.subf %107, %94 : vector<8x16xf32>
    %109 = arith.mulf %106, %108 : vector<8x16xf32>
    %110 = arith.addf %94, %109 : vector<8x16xf32>
    %111 = vector.shape_cast %110 : vector<8x16xf32> to vector<1x8x16xf32>
    %c0_45 = arith.constant 0 : index
    %c0_46 = arith.constant 0 : index
    %c0_47 = arith.constant 0 : index
    %112 = vector.load %arg10[%c0_45, %c0_46, %c0_47] : memref<1x8x16xf32, #tpu.memory_space<vmem>>, vector<1x8x16xf32>
    tpu.vector_store %arg10[%c0_45, %c0_46, %c0_47], %111 {strides = array<i32>} : memref<1x8x16xf32, #tpu.memory_space<vmem>>, vector<1x8x16xf32>,
    return
  }
  func.func @transform_0(%arg0: i32) -> (i32, i32, i32) {
    %c0_i32 = arith.constant 0 : i32
    %c0_i32_0 = arith.constant 0 : i32
    %c0_i32_1 = arith.constant 0 : i32
    return %arg0, %c0_i32, %c0_i32_0 : i32, i32, i32
  }
  func.func @transform_1(%arg0: i32) -> (i32, i32, i32) {
    %c0_i32 = arith.constant 0 : i32
    %c0_i32_0 = arith.constant 0 : i32
    %c0_i32_1 = arith.constant 0 : i32
    return %arg0, %c0_i32, %c0_i32_0 : i32, i32, i32
  }
  func.func @transform_2(%arg0: i32) -> (i32, i32, i32) {
    %c0_i32 = arith.constant 0 : i32
    %c0_i32_0 = arith.constant 0 : i32
    %c0_i32_1 = arith.constant 0 : i32
    return %arg0, %c0_i32, %c0_i32_0 : i32, i32, i32
  }
  func.func @transform_3(%arg0: i32) -> (i32, i32) {
    %c0_i32 = arith.constant 0 : i32
    %c0_i32_0 = arith.constant 0 : i32
    %c0_i32_1 = arith.constant 0 : i32
    return %c0_i32, %c0_i32_0 : i32, i32
  }
  func.func @transform_4(%arg0: i32) -> (i32, i32) {
    %c0_i32 = arith.constant 0 : i32
    %c0_i32_0 = arith.constant 0 : i32
    %c0_i32_1 = arith.constant 0 : i32
    return %c0_i32, %c0_i32_0 : i32, i32
  }
  func.func @transform_5(%arg0: i32) -> (i32, i32) {
    %c0_i32 = arith.constant 0 : i32
    %c0_i32_0 = arith.constant 0 : i32
    %c0_i32_1 = arith.constant 0 : i32
    return %c0_i32, %c0_i32_0 : i32, i32
  }
  func.func @transform_6(%arg0: i32) -> (i32, i32) {
    %c0_i32 = arith.constant 0 : i32
    %c0_i32_0 = arith.constant 0 : i32
    %c0_i32_1 = arith.constant 0 : i32
    return %c0_i32, %c0_i32_0 : i32, i32
  }
  func.func @transform_7(%arg0: i32) -> (i32, i32) {
    %c0_i32 = arith.constant 0 : i32
    %c0_i32_0 = arith.constant 0 : i32
    %c0_i32_1 = arith.constant 0 : i32
    return %c0_i32, %c0_i32_0 : i32, i32
  }
  func.func @transform_8(%arg0: i32) -> (i32, i32) {
    %c0_i32 = arith.constant 0 : i32
    %c0_i32_0 = arith.constant 0 : i32
    %c0_i32_1 = arith.constant 0 : i32
    return %c0_i32, %c0_i32_0 : i32, i32
  }
  func.func @transform_9(%arg0: i32) -> (i32, i32, i32) {
    %c0_i32 = arith.constant 0 : i32
    %c0_i32_0 = arith.constant 0 : i32
    %c0_i32_1 = arith.constant 0 : i32
    return %arg0, %c0_i32, %c0_i32_0 : i32, i32, i32
  }
}

</mosaic_0001>

<llo_original>
// kernel: tpu_custom_call.1
$region0: #{tpu_custom_call.1}
  #allocation0 [shape = 'u32[]', space=smem, size = 0x4, offset = 0x4, fixed_abs, tag = 'smem constant byte address 0x4 - core index']
  #allocation1 [shape = 'u32[144,128]{1,0:T(1,128)}', space=vmem, size = 0x12000, scoped, tag = 'internal scratch']
  %s0 = inlined_call_operand.vmem [shape: bf16[2,8,16], index: 0, kind: input, shape index: {}]
  %s1 = inlined_call_operand.vmem [shape: bf16[2,8,16], index: 1, kind: input, shape index: {}]
  %s2 = inlined_call_operand.vmem [shape: bf16[2,8,16], index: 2, kind: input, shape index: {}]
  %s3 = inlined_call_operand.vmem [shape: bf16[16,32], index: 3, kind: input, shape index: {}]
  %s4 = inlined_call_operand.vmem [shape: bf16[16,32], index: 4, kind: input, shape index: {}]
  %s5 = inlined_call_operand.vmem [shape: bf16[16,32], index: 5, kind: input, shape index: {}]
  %s6 = inlined_call_operand.vmem [shape: bf16[32,16], index: 6, kind: input, shape index: {}]
  %s7 = inlined_call_operand.vmem [shape: bf16[32,16], index: 7, kind: input, shape index: {}]
  %s8 = inlined_call_operand.vmem [shape: f32[1,16], index: 8, kind: input, shape index: {}]
  %s9 = inlined_call_operand.hbm [shape: f32[2,8,16], index: 9, kind: output, shape index: {}]
  %s10 = sld [smem:[#allocation0]]
  $region69: #{tpu_custom_call.1} parent=0
    _
  %s12 = ssub.s32 1, %s10
  %s13 = scalar_select 0, %s12, %s10
  $region1: #{tpu_custom_call.1} parent=0
    #allocation2 [shape = 'u8[8192]{0}', space=vmem, size = 0x2000, scoped, tag = 'output window, operand 0']
    #allocation3 [shape = 's32[2]{0}', space=sflag, size = 0x8, scoped, tag = 'scoped memory for tpu_custom_call.1']
    %14 = vsyncpa [#allocation3], 0
    %s15 = scalar_lea.sflag [#allocation3], 1
    %16 = vsyncpa %s15, 0
    loop: start=0, step=1, limit=4
    $region2: #{tpu_custom_call.1} parent=1 // loop_pre_header
      _
    $region3: #{tpu_custom_call.1} parent=1 // loop_header
      %s18 = sphi 0, %s22
      %p19 = scmp.ge.s32.totalorder %s18, 4
      %s28 = sphi 0, %s30
      %s31 = sphi 0, %s28
      %s32 = sphi 0, %s31
      %s48 = sphi 0, %s32
      %s54 = sphi 0, %s56
      %s57 = sphi 0, %s54
      %s58 = sphi 0, %s57
      %s74 = sphi 0, %s58
      %s80 = sphi 0, %s82
      %s83 = sphi 0, %s80
      %s84 = sphi 0, %s83
      %s100 = sphi 0, %s84
      %s104 = sphi 0, %s104
      %s106 = sphi 0, %s104
      %s107 = sphi 0, %s106
      %s121 = sphi 0, %s107
      %s125 = sphi 0, %s125
      %s127 = sphi 0, %s125
      %s128 = sphi 0, %s127
      %s142 = sphi 0, %s128
      %s146 = sphi 0, %s146
      %s148 = sphi 0, %s146
      %s149 = sphi 0, %s148
      %s163 = sphi 0, %s149
      %s167 = sphi 0, %s167
      %s169 = sphi 0, %s167
      %s170 = sphi 0, %s169
      %s184 = sphi 0, %s170
      %s188 = sphi 0, %s188
      %s190 = sphi 0, %s188
      %s191 = sphi 0, %s190
      %s205 = sphi 0, %s191
      %s209 = sphi 0, %s209
      %s211 = sphi 0, %s209
      %s212 = sphi 0, %s211
      %s226 = sphi 0, %s212
      %s232 = sphi 0, %s234
      %s235 = sphi 0, %s232
      %s236 = sphi 0, %s235
      %s252 = sphi 0, %s236
    $region4: #{tpu_custom_call.1} parent=1 // loop_header_branch
      %21 = sbr.rel (%p19) target = $region8
    $region5: #{tpu_custom_call.1} parent=1 // loop_body
      %s23 = ssub.s32 %s18, 1
      %s24 = ssub.s32 %s18, 2
      %s25 = sadd.s32 %s18, 1
      %s26 = ssub.s32 %s18, %s25
      %p27 = scmp.eq.s32.totalorder %s26, 0
      %s29 = sadd.s32 %s28, 1
      %s30 = scalar_select %p27, %s28, %s29
      %p33 = pneg %p27
      %p34 = scmp.eq.s32.totalorder %s18, 1
      %p35 = por %p33, %p34
      %p36 = scmp.ne.s32.totalorder %s28, %s31
      %p37 = scmp.eq.s32.totalorder %s18, 0
      %p38 = por %p36, %p37
      %p39 = scmp.ne.s32.totalorder %s28, %s31
      %p40 = scmp.eq.s32.totalorder %s23, 1
      %p41 = por %p39, %p40
      %p42 = scmp.ne.s32.totalorder %s31, %s32
      %p43 = scmp.eq.s32.totalorder %s23, 0
      %p44 = por %p42, %p43
      %p45 = scmp.ne.s32.totalorder %s31, %s32
      %p46 = scmp.eq.s32.totalorder %s24, 1
      %p47 = por %p45, %p46
      %p49 = scmp.ne.s32.totalorder %s32, %s48
      %p50 = scmp.eq.s32.totalorder %s24, 0
      %p51 = por %p49, %p50
      %s52 = ssub.s32 %s18, %s25
      %p53 = scmp.eq.s32.totalorder %s52, 0
      %s55 = sadd.s32 %s54, 1
      %s56 = scalar_select %p53, %s54, %s55
      %p59 = pneg %p53
      %p60 = scmp.eq.s32.totalorder %s18, 1
      %p61 = por %p59, %p60
      %p62 = scmp.ne.s32.totalorder %s54, %s57
      %p63 = scmp.eq.s32.totalorder %s18, 0
      %p64 = por %p62, %p63
      %p65 = scmp.ne.s32.totalorder %s54, %s57
      %p66 = scmp.eq.s32.totalorder %s23, 1
      %p67 = por %p65, %p66
      %p68 = scmp.ne.s32.totalorder %s57, %s58
      %p69 = scmp.eq.s32.totalorder %s23, 0
      %p70 = por %p68, %p69
      %p71 = scmp.ne.s32.totalorder %s57, %s58
      %p72 = scmp.eq.s32.totalorder %s24, 1
      %p73 = por %p71, %p72
      %p75 = scmp.ne.s32.totalorder %s58, %s74
      %p76 = scmp.eq.s32.totalorder %s24, 0
      %p77 = por %p75, %p76
      %s78 = ssub.s32 %s18, %s25
      %p79 = scmp.eq.s32.totalorder %s78, 0
      %s81 = sadd.s32 %s80, 1
      %s82 = scalar_select %p79, %s80, %s81
      %p85 = pneg %p79
      %p86 = scmp.eq.s32.totalorder %s18, 1
      %p87 = por %p85, %p86
      %p88 = scmp.ne.s32.totalorder %s80, %s83
      %p89 = scmp.eq.s32.totalorder %s18, 0
      %p90 = por %p88, %p89
      %p91 = scmp.ne.s32.totalorder %s80, %s83
      %p92 = scmp.eq.s32.totalorder %s23, 1
      %p93 = por %p91, %p92
      %p94 = scmp.ne.s32.totalorder %s83, %s84
      %p95 = scmp.eq.s32.totalorder %s23, 0
      %p96 = por %p94, %p95
      %p97 = scmp.ne.s32.totalorder %s83, %s84
      %p98 = scmp.eq.s32.totalorder %s24, 1
      %p99 = por %p97, %p98
      %p101 = scmp.ne.s32.totalorder %s84, %s100
      %p102 = scmp.eq.s32.totalorder %s24, 0
      %p103 = por %p101, %p102
      %s105 = sadd.s32 %s104, 1
      %p108 = scmp.eq.s32.totalorder %s18, 1
      %p109 = scmp.ne.s32.totalorder %s104, %s106
      %p110 = scmp.eq.s32.totalorder %s18, 0
      %p111 = por %p109, %p110
      %p112 = scmp.ne.s32.totalorder %s104, %s106
      %p113 = scmp.eq.s32.totalorder %s23, 1
      %p114 = por %p112, %p113
      %p115 = scmp.ne.s32.totalorder %s106, %s107
      %p116 = scmp.eq.s32.totalorder %s23, 0
      %p117 = por %p115, %p116
      %p118 = scmp.ne.s32.totalorder %s106, %s107
      %p119 = scmp.eq.s32.totalorder %s24, 1
      %p120 = por %p118, %p119
      %p122 = scmp.ne.s32.totalorder %s107, %s121
      %p123 = scmp.eq.s32.totalorder %s24, 0
      %p124 = por %p122, %p123
      %s126 = sadd.s32 %s125, 1
      %p129 = scmp.eq.s32.totalorder %s18, 1
      %p130 = scmp.ne.s32.totalorder %s125, %s127
      %p131 = scmp.eq.s32.totalorder %s18, 0
      %p132 = por %p130, %p131
      %p133 = scmp.ne.s32.totalorder %s125, %s127
      %p134 = scmp.eq.s32.totalorder %s23, 1
      %p135 = por %p133, %p134
      %p136 = scmp.ne.s32.totalorder %s127, %s128
      %p137 = scmp.eq.s32.totalorder %s23, 0
      %p138 = por %p136, %p137
      %p139 = scmp.ne.s32.totalorder %s127, %s128
      %p140 = scmp.eq.s32.totalorder %s24, 1
      %p141 = por %p139, %p140
      %p143 = scmp.ne.s32.totalorder %s128, %s142
      %p144 = scmp.eq.s32.totalorder %s24, 0
      %p145 = por %p143, %p144
      %s147 = sadd.s32 %s146, 1
      %p150 = scmp.eq.s32.totalorder %s18, 1
      %p151 = scmp.ne.s32.totalorder %s146, %s148
      %p152 = scmp.eq.s32.totalorder %s18, 0
      %p153 = por %p151, %p152
      %p154 = scmp.ne.s32.totalorder %s146, %s148
      %p155 = scmp.eq.s32.totalorder %s23, 1
      %p156 = por %p154, %p155
      %p157 = scmp.ne.s32.totalorder %s148, %s149
      %p158 = scmp.eq.s32.totalorder %s23, 0
      %p159 = por %p157, %p158
      %p160 = scmp.ne.s32.totalorder %s148, %s149
      %p161 = scmp.eq.s32.totalorder %s24, 1
      %p162 = por %p160, %p161
      %p164 = scmp.ne.s32.totalorder %s149, %s163
      %p165 = scmp.eq.s32.totalorder %s24, 0
      %p166 = por %p164, %p165
      %s168 = sadd.s32 %s167, 1
      %p171 = scmp.eq.s32.totalorder %s18, 1
      %p172 = scmp.ne.s32.totalorder %s167, %s169
      %p173 = scmp.eq.s32.totalorder %s18, 0
      %p174 = por %p172, %p173
      %p175 = scmp.ne.s32.totalorder %s167, %s169
      %p176 = scmp.eq.s32.totalorder %s23, 1
      %p177 = por %p175, %p176
      %p178 = scmp.ne.s32.totalorder %s169, %s170
      %p179 = scmp.eq.s32.totalorder %s23, 0
      %p180 = por %p178, %p179
      %p181 = scmp.ne.s32.totalorder %s169, %s170
      %p182 = scmp.eq.s32.totalorder %s24, 1
      %p183 = por %p181, %p182
      %p185 = scmp.ne.s32.totalorder %s170, %s184
      %p186 = scmp.eq.s32.totalorder %s24, 0
      %p187 = por %p185, %p186
      %s189 = sadd.s32 %s188, 1
      %p192 = scmp.eq.s32.totalorder %s18, 1
      %p193 = scmp.ne.s32.totalorder %s188, %s190
      %p194 = scmp.eq.s32.totalorder %s18, 0
      %p195 = por %p193, %p194
      %p196 = scmp.ne.s32.totalorder %s188, %s190
      %p197 = scmp.eq.s32.totalorder %s23, 1
      %p198 = por %p196, %p197
      %p199 = scmp.ne.s32.totalorder %s190, %s191
      %p200 = scmp.eq.s32.totalorder %s23, 0
      %p201 = por %p199, %p200
      %p202 = scmp.ne.s32.totalorder %s190, %s191
      %p203 = scmp.eq.s32.totalorder %s24, 1
      %p204 = por %p202, %p203
      %p206 = scmp.ne.s32.totalorder %s191, %s205
      %p207 = scmp.eq.s32.totalorder %s24, 0
      %p208 = por %p206, %p207
      %s210 = sadd.s32 %s209, 1
      %p213 = scmp.eq.s32.totalorder %s18, 1
      %p214 = scmp.ne.s32.totalorder %s209, %s211
      %p215 = scmp.eq.s32.totalorder %s18, 0
      %p216 = por %p214, %p215
      %p217 = scmp.ne.s32.totalorder %s209, %s211
      %p218 = scmp.eq.s32.totalorder %s23, 1
      %p219 = por %p217, %p218
      %p220 = scmp.ne.s32.totalorder %s211, %s212
      %p221 = scmp.eq.s32.totalorder %s23, 0
      %p222 = por %p220, %p221
      %p223 = scmp.ne.s32.totalorder %s211, %s212
      %p224 = scmp.eq.s32.totalorder %s24, 1
      %p225 = por %p223, %p224
      %p227 = scmp.ne.s32.totalorder %s212, %s226
      %p228 = scmp.eq.s32.totalorder %s24, 0
      %p229 = por %p227, %p228
      %s230 = ssub.s32 %s18, %s25
      %p231 = scmp.eq.s32.totalorder %s230, 0
      %s233 = sadd.s32 %s232, 1
      %s234 = scalar_select %p231, %s232, %s233
      %p237 = pneg %p231
      %p238 = scmp.eq.s32.totalorder %s18, 1
      %p239 = por %p237, %p238
      %p240 = scmp.ne.s32.totalorder %s232, %s235
      %p241 = scmp.eq.s32.totalorder %s18, 0
      %p242 = por %p240, %p241
      %p243 = scmp.ne.s32.totalorder %s232, %s235
      %p244 = scmp.eq.s32.totalorder %s23, 1
      %p245 = por %p243, %p244
      %p246 = scmp.ne.s32.totalorder %s235, %s236
      %p247 = scmp.eq.s32.totalorder %s23, 0
      %p248 = por %p246, %p247
      %p249 = scmp.ne.s32.totalorder %s235, %s236
      %p250 = scmp.eq.s32.totalorder %s24, 1
      %p251 = por %p249, %p250
      %p253 = scmp.ne.s32.totalorder %s236, %s252
      %p254 = scmp.eq.s32.totalorder %s24, 0
      %p255 = por %p253, %p254
      %p256 = scmp.le.s32.totalorder 1, %s18
      %p257 = scmp.lt.s32.totalorder %s18, 3
      %p258 = pnand %p256, %p257
      %p259 = pneg %p258
      // Predicated region
      $region9: #{tpu_custom_call.1} parent=5 // pred_check
        _
      $region10: #{tpu_custom_call.1} parent=5 // pred_check_branch
        %261 = sbr.rel (%p258) target = $region12
      $region11: #{tpu_custom_call.1} parent=5 // pred_region
        %s262 = ssub.s32 %s18, 1
        // Predicated region
        $region13: #{tpu_custom_call.1} parent=11 // pred_check
          %p263 = pneg %p117
        $region14: #{tpu_custom_call.1} parent=11 // pred_check_branch
          %265 = sbr.rel (%p263) target = $region16
        $region15: #{tpu_custom_call.1} parent=11 // pred_region
          _
        $region16: #{tpu_custom_call.1} parent=11 // pred_fallthru
          _
        // Predicated region
        $region17: #{tpu_custom_call.1} parent=11 // pred_check
          %p266 = pneg %p138
        $region18: #{tpu_custom_call.1} parent=11 // pred_check_branch
          %268 = sbr.rel (%p266) target = $region20
        $region19: #{tpu_custom_call.1} parent=11 // pred_region
          _
        $region20: #{tpu_custom_call.1} parent=11 // pred_fallthru
          _
        // Predicated region
        $region21: #{tpu_custom_call.1} parent=11 // pred_check
          %p269 = pneg %p159
        $region22: #{tpu_custom_call.1} parent=11 // pred_check_branch
          %271 = sbr.rel (%p269) target = $region24
        $region23: #{tpu_custom_call.1} parent=11 // pred_region
          _
        $region24: #{tpu_custom_call.1} parent=11 // pred_fallthru
          _
        // Predicated region
        $region25: #{tpu_custom_call.1} parent=11 // pred_check
          %p272 = pneg %p180
        $region26: #{tpu_custom_call.1} parent=11 // pred_check_branch
          %274 = sbr.rel (%p272) target = $region28
        $region27: #{tpu_custom_call.1} parent=11 // pred_region
          _
        $region28: #{tpu_custom_call.1} parent=11 // pred_fallthru
          _
        // Predicated region
        $region29: #{tpu_custom_call.1} parent=11 // pred_check
          %p275 = pneg %p201
        $region30: #{tpu_custom_call.1} parent=11 // pred_check_branch
          %277 = sbr.rel (%p275) target = $region32
        $region31: #{tpu_custom_call.1} parent=11 // pred_region
          _
        $region32: #{tpu_custom_call.1} parent=11 // pred_fallthru
          _
        // Predicated region
        $region33: #{tpu_custom_call.1} parent=11 // pred_check
          %p278 = pneg %p222
        $region34: #{tpu_custom_call.1} parent=11 // pred_check_branch
          %280 = sbr.rel (%p278) target = $region36
        $region35: #{tpu_custom_call.1} parent=11 // pred_region
          _
        $region36: #{tpu_custom_call.1} parent=11 // pred_fallthru
          _
      $region12: #{tpu_custom_call.1} parent=5 // pred_fallthru
        _
      %p281 = scmp.lt.s32.totalorder %s18, 2
      // Predicated region
      $region37: #{tpu_custom_call.1} parent=5 // pred_check
        %p282 = pneg %p281
      $region38: #{tpu_custom_call.1} parent=5 // pred_check_branch
        %284 = sbr.rel (%p282) target = $region40
      $region39: #{tpu_custom_call.1} parent=5 // pred_region
        // Predicated region
        $region41: #{tpu_custom_call.1} parent=39 // pred_check
          %p285 = pneg %p38
        $region42: #{tpu_custom_call.1} parent=39 // pred_check_branch
          %287 = sbr.rel (%p285) target = $region44
        $region43: #{tpu_custom_call.1} parent=39 // pred_region
          %p288 = scmp.lt.s32.totalorder %s18, 1
          %s289 = scalar_select %p288, %s18, 1
          %s290 = smul.addr %s289, 4
          %s291 = scalar_lea.vmem %s0, %s290
        $region44: #{tpu_custom_call.1} parent=39 // pred_fallthru
          _
        // Predicated region
        $region45: #{tpu_custom_call.1} parent=39 // pred_check
          %p292 = pneg %p64
        $region46: #{tpu_custom_call.1} parent=39 // pred_check_branch
          %294 = sbr.rel (%p292) target = $region48
        $region47: #{tpu_custom_call.1} parent=39 // pred_region
          %p295 = scmp.lt.s32.totalorder %s18, 1
          %s296 = scalar_select %p295, %s18, 1
          %s297 = smul.addr %s296, 4
          %s298 = scalar_lea.vmem %s1, %s297
        $region48: #{tpu_custom_call.1} parent=39 // pred_fallthru
          _
        // Predicated region
        $region49: #{tpu_custom_call.1} parent=39 // pred_check
          %p299 = pneg %p90
        $region50: #{tpu_custom_call.1} parent=39 // pred_check_branch
          %301 = sbr.rel (%p299) target = $region52
        $region51: #{tpu_custom_call.1} parent=39 // pred_region
          %p302 = scmp.lt.s32.totalorder %s18, 1
          %s303 = scalar_select %p302, %s18, 1
          %s304 = smul.addr %s303, 4
          %s305 = scalar_lea.vmem %s2, %s304
        $region52: #{tpu_custom_call.1} parent=39 // pred_fallthru
          _
      $region40: #{tpu_custom_call.1} parent=5 // pred_fallthru
        _
      %p306 = scmp.le.s32.totalorder 1, %s18
      %p307 = scmp.lt.s32.totalorder %s18, 3
      %p308 = pnand %p306, %p307
      %p309 = pneg %p308
      // Predicated region
      $region53: #{tpu_custom_call.1} parent=5 // pred_check
        _
      $region54: #{tpu_custom_call.1} parent=5 // pred_check_branch
        %311 = sbr.rel (%p308) target = $region56
      $region55: #{tpu_custom_call.1} parent=5 // pred_region
        %s312 = ssub.s32 %s18, 1
        %p313 = scmp.lt.s32.totalorder %s23, 1
        %s314 = scalar_select %p313, %s23, 1
        %s315 = smul.addr %s314, 4
        %s316 = scalar_lea.vmem %s0, %s315
        %p317 = pneg %p44
        %p318 = pneg %p41
        %p319 = scmp.lt.s32.totalorder %s23, 1
        %s320 = scalar_select %p319, %s23, 1
        %s321 = smul.addr %s320, 4
        %s322 = scalar_lea.vmem %s1, %s321
        %p323 = pneg %p70
        %p324 = pneg %p67
        %p325 = scmp.lt.s32.totalorder %s23, 1
        %s326 = scalar_select %p325, %s23, 1
        %s327 = smul.addr %s326, 4
        %s328 = scalar_lea.vmem %s2, %s327
        %p329 = pneg %p96
        %p330 = pneg %p93
        %p331 = pneg %p117
        %p332 = pneg %p114
        %p333 = pneg %p138
        %p334 = pneg %p135
        %p335 = pneg %p159
        %p336 = pneg %p156
        %p337 = pneg %p180
        %p338 = pneg %p177
        %p339 = pneg %p201
        %p340 = pneg %p198
        %p341 = pneg %p222
        %p342 = pneg %p219
        %p343 = pneg %p248
        %p344 = pneg %p245
        %s345 = sand.u32 %s235, 1
        %s346 = scalar_lea.sflag [#allocation3], %s345
        %s347 = sand.u32 %s235, 1
        %s348 = smul.addr %s347, 8
        %s349 = scalar_lea.vmem [#allocation2], %s348
        %p350 = scmp.lt.s32.totalorder %s23, 1
        %s351 = scalar_select %p350, %s23, 1
        %s352 = smul.addr %s351, 4
        %s353 = scalar_lea.vmem %s0, %s352
        %p354 = scmp.lt.s32.totalorder %s23, 1
        %s355 = scalar_select %p354, %s23, 1
        %s356 = smul.addr %s355, 4
        %s357 = scalar_lea.vmem %s1, %s356
        %p358 = scmp.lt.s32.totalorder %s23, 1
        %s359 = scalar_select %p358, %s23, 1
        %s360 = smul.addr %s359, 4
        %s361 = scalar_lea.vmem %s2, %s360
        %v363 = vld [vmem:[%s353] sm:$0xf]
        %v364 = vld [vmem:[%s357] sm:$0xf]
        %v365 = vld [vmem:[%s361] sm:$0xf]
        %v366 = vld [vmem:[%s3] sm:$0xf]
        %v367 = vld [vmem:[%s3 + $0x4] sm:$0xf]
        %v370 = vunpack.c.l.b16 %v366
        %v371 = vunpack.c.l.b16 %v367
        %v372 = vpack.c.b16 %v371, %v370
        %vm374 = vcmask 130048
        %v376 = vsel %vm374, %v363, 0
        %378 = vmatprep.subr.bf16.mxu0 0
        %379 = vmatpush1.bf16.msra.mxu0 0
        %380 = vmatprep.subr.bf16.mxu0 0
        %381 = vmatpush1.bf16.msra.mxu0 0
        %382 = vmatprep.subr.bf16.mxu0 0
        %383 = vmatpush1.bf16.msra.mxu0 0
        %384 = vmatprep.subr.bf16.mxu0 0
        %385 = vmatpush1.bf16.msra.mxu0 0
        %386 = vmatprep.subr.bf16.mxu0 0
        %387 = vmatpush1.bf16.msra.mxu0 0
        %388 = vmatprep.subr.bf16.mxu0 0
        %389 = vmatpush1.bf16.msra.mxu0 0
        %390 = vmatprep.subr.bf16.mxu0 0
        %391 = vmatpush1.bf16.msra.mxu0 0
        %392 = vmatprep.subr.bf16.mxu0 0
        %393 = vmatpush1.bf16.msra.mxu0 %v372
        %394 = vmatprep.subr.bf16.mxu0 0
        %395 = vmatpush2.bf16.msra.mxu0 0
        %396 = vmatprep.subr.bf16.mxu0 0
        %397 = vmatpush2.bf16.msra.mxu0 0
        %398 = vmatprep.subr.bf16.mxu0 0
        %399 = vmatpush2.bf16.msra.mxu0 0
        %400 = vmatprep.subr.bf16.mxu0 0
        %401 = vmatpush2.bf16.msra.mxu0 0
        %402 = vmatprep.subr.bf16.mxu0 0
        %403 = vmatpush2.bf16.msra.mxu0 0
        %404 = vmatprep.subr.bf16.mxu0 0
        %405 = vmatpush2.bf16.msra.mxu0 0
        %406 = vmatprep.subr.bf16.mxu0 0
        %407 = vmatpush2.bf16.msra.mxu0 0
        %408 = vmatprep.subr.bf16.mxu0 0
        %409 = vmatpush2.bf16.msra.mxu0 0
        %410 = vmatprep.mubr.bf16.mxu0 0
        %411 = vmatmul.mubr.bf16.gmra.mxu0 %v376
        %v412 = vpop.f32.mrf.mxu0
        %v413 = vadd.f32 0.0, %v412
        %v414 = vpop.f32.mrf.mxu0
        %v415 = vpop.f32.mrf.mxu0
        %v416 = vpop.f32.mrf.mxu0
        %417 = vdwg.mxu0
        %v418 = vld [vmem:[%s4] sm:$0xf]
        %v419 = vld [vmem:[%s4 + $0x4] sm:$0xf]
        %v422 = vunpack.c.l.b16 %v418
        %v423 = vunpack.c.l.b16 %v419
        %v424 = vpack.c.b16 %v423, %v422
        %v427 = vsel %vm374, %v364, 0
        %429 = vmatprep.subr.bf16.mxu0 0
        %430 = vmatpush1.bf16.msra.mxu0 0
        %431 = vmatprep.subr.bf16.mxu0 0
        %432 = vmatpush1.bf16.msra.mxu0 0
        %433 = vmatprep.subr.bf16.mxu0 0
        %434 = vmatpush1.bf16.msra.mxu0 0
        %435 = vmatprep.subr.bf16.mxu0 0
        %436 = vmatpush1.bf16.msra.mxu0 0
        %437 = vmatprep.subr.bf16.mxu0 0
        %438 = vmatpush1.bf16.msra.mxu0 0
        %439 = vmatprep.subr.bf16.mxu0 0
        %440 = vmatpush1.bf16.msra.mxu0 0
        %441 = vmatprep.subr.bf16.mxu0 0
        %442 = vmatpush1.bf16.msra.mxu0 0
        %443 = vmatprep.subr.bf16.mxu0 0
        %444 = vmatpush1.bf16.msra.mxu0 %v424
        %445 = vmatprep.subr.bf16.mxu0 0
        %446 = vmatpush2.bf16.msra.mxu0 0
        %447 = vmatprep.subr.bf16.mxu0 0
        %448 = vmatpush2.bf16.msra.mxu0 0
        %449 = vmatprep.subr.bf16.mxu0 0
        %450 = vmatpush2.bf16.msra.mxu0 0
        %451 = vmatprep.subr.bf16.mxu0 0
        %452 = vmatpush2.bf16.msra.mxu0 0
        %453 = vmatprep.subr.bf16.mxu0 0
        %454 = vmatpush2.bf16.msra.mxu0 0
        %455 = vmatprep.subr.bf16.mxu0 0
        %456 = vmatpush2.bf16.msra.mxu0 0
        %457 = vmatprep.subr.bf16.mxu0 0
        %458 = vmatpush2.bf16.msra.mxu0 0
        %459 = vmatprep.subr.bf16.mxu0 0
        %460 = vmatpush2.bf16.msra.mxu0 0
        %461 = vmatprep.mubr.bf16.mxu0 0
        %462 = vmatmul.mubr.bf16.gmra.mxu0 %v427
        %v463 = vpop.f32.mrf.mxu0
        %v464 = vadd.f32 0.0, %v463
        %v465 = vpop.f32.mrf.mxu0
        %v466 = vpop.f32.mrf.mxu0
        %v467 = vpop.f32.mrf.mxu0
        %468 = vdwg.mxu0
        %v469 = vld [vmem:[%s5] sm:$0xf]
        %v470 = vld [vmem:[%s5 + $0x4] sm:$0xf]
        %v473 = vunpack.c.l.b16 %v469
        %v474 = vunpack.c.l.b16 %v470
        %v475 = vpack.c.b16 %v474, %v473
        %v478 = vsel %vm374, %v365, 0
        %480 = vmatprep.subr.bf16.mxu0 0
        %481 = vmatpush1.bf16.msra.mxu0 0
        %482 = vmatprep.subr.bf16.mxu0 0
        %483 = vmatpush1.bf16.msra.mxu0 0
        %484 = vmatprep.subr.bf16.mxu0 0
        %485 = vmatpush1.bf16.msra.mxu0 0
        %486 = vmatprep.subr.bf16.mxu0 0
        %487 = vmatpush1.bf16.msra.mxu0 0
        %488 = vmatprep.subr.bf16.mxu0 0
        %489 = vmatpush1.bf16.msra.mxu0 0
        %490 = vmatprep.subr.bf16.mxu0 0
        %491 = vmatpush1.bf16.msra.mxu0 0
        %492 = vmatprep.subr.bf16.mxu0 0
        %493 = vmatpush1.bf16.msra.mxu0 0
        %494 = vmatprep.subr.bf16.mxu0 0
        %495 = vmatpush1.bf16.msra.mxu0 %v475
        %496 = vmatprep.subr.bf16.mxu0 0
        %497 = vmatpush2.bf16.msra.mxu0 0
        %498 = vmatprep.subr.bf16.mxu0 0
        %499 = vmatpush2.bf16.msra.mxu0 0
        %500 = vmatprep.subr.bf16.mxu0 0
        %501 = vmatpush2.bf16.msra.mxu0 0
        %502 = vmatprep.subr.bf16.mxu0 0
        %503 = vmatpush2.bf16.msra.mxu0 0
        %504 = vmatprep.subr.bf16.mxu0 0
        %505 = vmatpush2.bf16.msra.mxu0 0
        %506 = vmatprep.subr.bf16.mxu0 0
        %507 = vmatpush2.bf16.msra.mxu0 0
        %508 = vmatprep.subr.bf16.mxu0 0
        %509 = vmatpush2.bf16.msra.mxu0 0
        %510 = vmatprep.subr.bf16.mxu0 0
        %511 = vmatpush2.bf16.msra.mxu0 0
        %512 = vmatprep.mubr.bf16.mxu0 0
        %513 = vmatmul.mubr.bf16.gmra.mxu0 %v478
        %v514 = vpop.f32.mrf.mxu0
        %v515 = vadd.f32 0.0, %v514
        %v516 = vpop.f32.mrf.mxu0
        %v517 = vpop.f32.mrf.mxu0
        %v518 = vpop.f32.mrf.mxu0
        %519 = vdwg.mxu0
        %v520 = vpack.c.bf16 %v413, %v413
        %v521 = vpack.c.bf16 %v464, %v464
        %v522 = vpack.c.bf16 %v515, %v515
        %vm523 = vcmask 64512
        %v525 = vsel %vm523, %v520, 0
        %v528 = vsel %vm523, %v521, 0
        %530 = vmatprep.subr.bf16.mxu0 0
        %531 = vmatpush1.bf16.xpose.msra.mxu0 0
        %532 = vmatprep.subr.bf16.mxu0 0
        %533 = vmatpush1.bf16.xpose.msra.mxu0 0
        %534 = vmatprep.subr.bf16.mxu0 0
        %535 = vmatpush1.bf16.xpose.msra.mxu0 0
        %536 = vmatprep.subr.bf16.mxu0 0
        %537 = vmatpush1.bf16.xpose.msra.mxu0 0
        %538 = vmatprep.subr.bf16.mxu0 0
        %539 = vmatpush1.bf16.xpose.msra.mxu0 0
        %540 = vmatprep.subr.bf16.mxu0 0
        %541 = vmatpush1.bf16.xpose.msra.mxu0 0
        %542 = vmatprep.subr.bf16.mxu0 0
        %543 = vmatpush1.bf16.xpose.msra.mxu0 0
        %544 = vmatprep.subr.bf16.mxu0 0
        %545 = vmatpush1.bf16.xpose.msra.mxu0 %v528
        %546 = vmatprep.subr.bf16.mxu0 0
        %547 = vmatpush2.bf16.xpose.msra.mxu0 0
        %548 = vmatprep.subr.bf16.mxu0 0
        %549 = vmatpush2.bf16.xpose.msra.mxu0 0
        %550 = vmatprep.subr.bf16.mxu0 0
        %551 = vmatpush2.bf16.xpose.msra.mxu0 0
        %552 = vmatprep.subr.bf16.mxu0 0
        %553 = vmatpush2.bf16.xpose.msra.mxu0 0
        %554 = vmatprep.subr.bf16.mxu0 0
        %555 = vmatpush2.bf16.xpose.msra.mxu0 0
        %556 = vmatprep.subr.bf16.mxu0 0
        %557 = vmatpush2.bf16.xpose.msra.mxu0 0
        %558 = vmatprep.subr.bf16.mxu0 0
        %559 = vmatpush2.bf16.xpose.msra.mxu0 0
        %560 = vmatprep.subr.bf16.mxu0 0
        %561 = vmatpush2.bf16.xpose.msra.mxu0 0
        %562 = vmatprep.mubr.bf16.mxu0 0
        %563 = vmatmul.mubr.bf16.gmra.mxu0 %v525
        %v564 = vpop.f32.mrf.mxu0
        %v565 = vadd.f32 0.0, %v564
        %v566 = vpop.f32.mrf.mxu0
        %v567 = vpop.f32.mrf.mxu0
        %v568 = vpop.f32.mrf.mxu0
        %569 = vdwg.mxu0
        %v570 = vmul.f32 %v565, 0.35355338
        %v571 = vsel %vm523, %v570, -inf
        %572 = vmax.xlane.f32.xlu0 %v571
        %v573 = vpop.xlane.xlu0 %572
        %v574 = vsub.f32 %v570, %v573
        %v575 = vmul.f32 %v574, 1.442695
        %v576 = vpow.pop %v575
        %v577 = vsel %vm523, %v576, 0.0
        %578 = vadd.xlane.f32.xlu0 %v577
        %v579 = vpop.xlane.xlu0 %578
        %v580 = vrcp.pop %v579
        %v581 = vmul.f32 %v576, %v580
        %v582 = vpack.c.bf16 %v581, %v581
        %v584 = vsel %vm523, %v582, 0
        %vm586 = vcmask 1043456
        %v588 = vsel %vm586, %v522, 0
        %590 = vmatprep.subr.bf16.mxu0 0
        %591 = vmatpush1.bf16.msra.mxu0 0
        %592 = vmatprep.subr.bf16.mxu0 0
        %593 = vmatpush1.bf16.msra.mxu0 0
        %594 = vmatprep.subr.bf16.mxu0 0
        %595 = vmatpush1.bf16.msra.mxu0 0
        %596 = vmatprep.subr.bf16.mxu0 0
        %597 = vmatpush1.bf16.msra.mxu0 0
        %598 = vmatprep.subr.bf16.mxu0 0
        %599 = vmatpush1.bf16.msra.mxu0 0
        %600 = vmatprep.subr.bf16.mxu0 0
        %601 = vmatpush1.bf16.msra.mxu0 0
        %602 = vmatprep.subr.bf16.mxu0 0
        %603 = vmatpush1.bf16.msra.mxu0 0
        %604 = vmatprep.subr.bf16.mxu0 0
        %605 = vmatpush1.bf16.msra.mxu0 %v588
        %606 = vmatprep.subr.bf16.mxu0 0
        %607 = vmatpush2.bf16.msra.mxu0 0
        %608 = vmatprep.subr.bf16.mxu0 0
        %609 = vmatpush2.bf16.msra.mxu0 0
        %610 = vmatprep.subr.bf16.mxu0 0
        %611 = vmatpush2.bf16.msra.mxu0 0
        %612 = vmatprep.subr.bf16.mxu0 0
        %613 = vmatpush2.bf16.msra.mxu0 0
        %614 = vmatprep.subr.bf16.mxu0 0
        %615 = vmatpush2.bf16.msra.mxu0 0
        %616 = vmatprep.subr.bf16.mxu0 0
        %617 = vmatpush2.bf16.msra.mxu0 0
        %618 = vmatprep.subr.bf16.mxu0 0
        %619 = vmatpush2.bf16.msra.mxu0 0
        %620 = vmatprep.subr.bf16.mxu0 0
        %621 = vmatpush2.bf16.msra.mxu0 0
        %622 = vmatprep.mubr.bf16.mxu0 0
        %623 = vmatmul.mubr.bf16.gmra.mxu0 %v584
        %v624 = vpop.f32.mrf.mxu0
        %v625 = vadd.f32 0.0, %v624
        %v626 = vpop.f32.mrf.mxu0
        %v627 = vpop.f32.mrf.mxu0
        %v628 = vpop.f32.mrf.mxu0
        %629 = vdwg.mxu0
        %631 = vrot.lane.b32.xlu0 %v520, 120
        %v632 = vpop.permute.xlu0 %631
        %634 = vrot.lane.b32.xlu0 %v521, 120
        %v635 = vpop.permute.xlu0 %634
        %v637 = vsel %vm523, %v632, 0
        %v640 = vsel %vm523, %v635, 0
        %642 = vmatprep.subr.bf16.mxu0 0
        %643 = vmatpush1.bf16.xpose.msra.mxu0 0
        %644 = vmatprep.subr.bf16.mxu0 0
        %645 = vmatpush1.bf16.xpose.msra.mxu0 0
        %646 = vmatprep.subr.bf16.mxu0 0
        %647 = vmatpush1.bf16.xpose.msra.mxu0 0
        %648 = vmatprep.subr.bf16.mxu0 0
        %649 = vmatpush1.bf16.xpose.msra.mxu0 0
        %650 = vmatprep.subr.bf16.mxu0 0
        %651 = vmatpush1.bf16.xpose.msra.mxu0 0
        %652 = vmatprep.subr.bf16.mxu0 0
        %653 = vmatpush1.bf16.xpose.msra.mxu0 0
        %654 = vmatprep.subr.bf16.mxu0 0
        %655 = vmatpush1.bf16.xpose.msra.mxu0 0
        %656 = vmatprep.subr.bf16.mxu0 0
        %657 = vmatpush1.bf16.xpose.msra.mxu0 %v640
        %658 = vmatprep.subr.bf16.mxu0 0
        %659 = vmatpush2.bf16.xpose.msra.mxu0 0
        %660 = vmatprep.subr.bf16.mxu0 0
        %661 = vmatpush2.bf16.xpose.msra.mxu0 0
        %662 = vmatprep.subr.bf16.mxu0 0
        %663 = vmatpush2.bf16.xpose.msra.mxu0 0
        %664 = vmatprep.subr.bf16.mxu0 0
        %665 = vmatpush2.bf16.xpose.msra.mxu0 0
        %666 = vmatprep.subr.bf16.mxu0 0
        %667 = vmatpush2.bf16.xpose.msra.mxu0 0
        %668 = vmatprep.subr.bf16.mxu0 0
        %669 = vmatpush2.bf16.xpose.msra.mxu0 0
        %670 = vmatprep.subr.bf16.mxu0 0
        %671 = vmatpush2.bf16.xpose.msra.mxu0 0
        %672 = vmatprep.subr.bf16.mxu0 0
        %673 = vmatpush2.bf16.xpose.msra.mxu0 0
        %674 = vmatprep.mubr.bf16.mxu0 0
        %675 = vmatmul.mubr.bf16.gmra.mxu0 %v637
        %v676 = vpop.f32.mrf.mxu0
        %v677 = vadd.f32 0.0, %v676
        %v678 = vpop.f32.mrf.mxu0
        %v679 = vpop.f32.mrf.mxu0
        %v680 = vpop.f32.mrf.mxu0
        %681 = vdwg.mxu0
        %v682 = vmul.f32 %v677, 0.35355338
        %v683 = vsel %vm523, %v682, -inf
        %684 = vmax.xlane.f32.xlu0 %v683
        %v685 = vpop.xlane.xlu0 %684
        %v686 = vsub.f32 %v682, %v685
        %v687 = vmul.f32 %v686, 1.442695
        %v688 = vpow.pop %v687
        %v689 = vsel %vm523, %v688, 0.0
        %690 = vadd.xlane.f32.xlu0 %v689
        %v691 = vpop.xlane.xlu0 %690
        %v692 = vrcp.pop %v691
        %v693 = vmul.f32 %v688, %v692
        %v694 = vpack.c.bf16 %v693, %v693
        %696 = vrot.lane.b32.xlu0 %v522, 120
        %v697 = vpop.permute.xlu0 %696
        %v699 = vsel %vm523, %v694, 0
        %v702 = vsel %vm586, %v697, 0
        %704 = vmatprep.subr.bf16.mxu0 0
        %705 = vmatpush1.bf16.msra.mxu0 0
        %706 = vmatprep.subr.bf16.mxu0 0
        %707 = vmatpush1.bf16.msra.mxu0 0
        %708 = vmatprep.subr.bf16.mxu0 0
        %709 = vmatpush1.bf16.msra.mxu0 0
        %710 = vmatprep.subr.bf16.mxu0 0
        %711 = vmatpush1.bf16.msra.mxu0 0
        %712 = vmatprep.subr.bf16.mxu0 0
        %713 = vmatpush1.bf16.msra.mxu0 0
        %714 = vmatprep.subr.bf16.mxu0 0
        %715 = vmatpush1.bf16.msra.mxu0 0
        %716 = vmatprep.subr.bf16.mxu0 0
        %717 = vmatpush1.bf16.msra.mxu0 0
        %718 = vmatprep.subr.bf16.mxu0 0
        %719 = vmatpush1.bf16.msra.mxu0 %v702
        %720 = vmatprep.subr.bf16.mxu0 0
        %721 = vmatpush2.bf16.msra.mxu0 0
        %722 = vmatprep.subr.bf16.mxu0 0
        %723 = vmatpush2.bf16.msra.mxu0 0
        %724 = vmatprep.subr.bf16.mxu0 0
        %725 = vmatpush2.bf16.msra.mxu0 0
        %726 = vmatprep.subr.bf16.mxu0 0
        %727 = vmatpush2.bf16.msra.mxu0 0
        %728 = vmatprep.subr.bf16.mxu0 0
        %729 = vmatpush2.bf16.msra.mxu0 0
        %730 = vmatprep.subr.bf16.mxu0 0
        %731 = vmatpush2.bf16.msra.mxu0 0
        %732 = vmatprep.subr.bf16.mxu0 0
        %733 = vmatpush2.bf16.msra.mxu0 0
        %734 = vmatprep.subr.bf16.mxu0 0
        %735 = vmatpush2.bf16.msra.mxu0 0
        %736 = vmatprep.mubr.bf16.mxu0 0
        %737 = vmatmul.mubr.bf16.gmra.mxu0 %v699
        %v738 = vpop.f32.mrf.mxu0
        %v739 = vadd.f32 0.0, %v738
        %v740 = vpop.f32.mrf.mxu0
        %v741 = vpop.f32.mrf.mxu0
        %v742 = vpop.f32.mrf.mxu0
        %743 = vdwg.mxu0
        %744 = vrot.lane.b32.xlu0 %v520, 112
        %v745 = vpop.permute.xlu0 %744
        %746 = vrot.lane.b32.xlu0 %v521, 112
        %v747 = vpop.permute.xlu0 %746
        %v749 = vsel %vm523, %v745, 0
        %v752 = vsel %vm523, %v747, 0
        %754 = vmatprep.subr.bf16.mxu0 0
        %755 = vmatpush1.bf16.xpose.msra.mxu0 0
        %756 = vmatprep.subr.bf16.mxu0 0
        %757 = vmatpush1.bf16.xpose.msra.mxu0 0
        %758 = vmatprep.subr.bf16.mxu0 0
        %759 = vmatpush1.bf16.xpose.msra.mxu0 0
        %760 = vmatprep.subr.bf16.mxu0 0
        %761 = vmatpush1.bf16.xpose.msra.mxu0 0
        %762 = vmatprep.subr.bf16.mxu0 0
        %763 = vmatpush1.bf16.xpose.msra.mxu0 0
        %764 = vmatprep.subr.bf16.mxu0 0
        %765 = vmatpush1.bf16.xpose.msra.mxu0 0
        %766 = vmatprep.subr.bf16.mxu0 0
        %767 = vmatpush1.bf16.xpose.msra.mxu0 0
        %768 = vmatprep.subr.bf16.mxu0 0
        %769 = vmatpush1.bf16.xpose.msra.mxu0 %v752
        %770 = vmatprep.subr.bf16.mxu0 0
        %771 = vmatpush2.bf16.xpose.msra.mxu0 0
        %772 = vmatprep.subr.bf16.mxu0 0
        %773 = vmatpush2.bf16.xpose.msra.mxu0 0
        %774 = vmatprep.subr.bf16.mxu0 0
        %775 = vmatpush2.bf16.xpose.msra.mxu0 0
        %776 = vmatprep.subr.bf16.mxu0 0
        %777 = vmatpush2.bf16.xpose.msra.mxu0 0
        %778 = vmatprep.subr.bf16.mxu0 0
        %779 = vmatpush2.bf16.xpose.msra.mxu0 0
        %780 = vmatprep.subr.bf16.mxu0 0
        %781 = vmatpush2.bf16.xpose.msra.mxu0 0
        %782 = vmatprep.subr.bf16.mxu0 0
        %783 = vmatpush2.bf16.xpose.msra.mxu0 0
        %784 = vmatprep.subr.bf16.mxu0 0
        %785 = vmatpush2.bf16.xpose.msra.mxu0 0
        %786 = vmatprep.mubr.bf16.mxu0 0
        %787 = vmatmul.mubr.bf16.gmra.mxu0 %v749
        %v788 = vpop.f32.mrf.mxu0
        %v789 = vadd.f32 0.0, %v788
        %v790 = vpop.f32.mrf.mxu0
        %v791 = vpop.f32.mrf.mxu0
        %v792 = vpop.f32.mrf.mxu0
        %793 = vdwg.mxu0
        %v794 = vmul.f32 %v789, 0.35355338
        %v795 = vsel %vm523, %v794, -inf
        %796 = vmax.xlane.f32.xlu0 %v795
        %v797 = vpop.xlane.xlu0 %796
        %v798 = vsub.f32 %v794, %v797
        %v799 = vmul.f32 %v798, 1.442695
        %v800 = vpow.pop %v799
        %v801 = vsel %vm523, %v800, 0.0
        %802 = vadd.xlane.f32.xlu0 %v801
        %v803 = vpop.xlane.xlu0 %802
        %v804 = vrcp.pop %v803
        %v805 = vmul.f32 %v800, %v804
        %v806 = vpack.c.bf16 %v805, %v805
        %807 = vrot.lane.b32.xlu0 %v522, 112
        %v808 = vpop.permute.xlu0 %807
        %v810 = vsel %vm523, %v806, 0
        %v813 = vsel %vm586, %v808, 0
        %815 = vmatprep.subr.bf16.mxu0 0
        %816 = vmatpush1.bf16.msra.mxu0 0
        %817 = vmatprep.subr.bf16.mxu0 0
        %818 = vmatpush1.bf16.msra.mxu0 0
        %819 = vmatprep.subr.bf16.mxu0 0
        %820 = vmatpush1.bf16.msra.mxu0 0
        %821 = vmatprep.subr.bf16.mxu0 0
        %822 = vmatpush1.bf16.msra.mxu0 0
        %823 = vmatprep.subr.bf16.mxu0 0
        %824 = vmatpush1.bf16.msra.mxu0 0
        %825 = vmatprep.subr.bf16.mxu0 0
        %826 = vmatpush1.bf16.msra.mxu0 0
        %827 = vmatprep.subr.bf16.mxu0 0
        %828 = vmatpush1.bf16.msra.mxu0 0
        %829 = vmatprep.subr.bf16.mxu0 0
        %830 = vmatpush1.bf16.msra.mxu0 %v813
        %831 = vmatprep.subr.bf16.mxu0 0
        %832 = vmatpush2.bf16.msra.mxu0 0
        %833 = vmatprep.subr.bf16.mxu0 0
        %834 = vmatpush2.bf16.msra.mxu0 0
        %835 = vmatprep.subr.bf16.mxu0 0
        %836 = vmatpush2.bf16.msra.mxu0 0
        %837 = vmatprep.subr.bf16.mxu0 0
        %838 = vmatpush2.bf16.msra.mxu0 0
        %839 = vmatprep.subr.bf16.mxu0 0
        %840 = vmatpush2.bf16.msra.mxu0 0
        %841 = vmatprep.subr.bf16.mxu0 0
        %842 = vmatpush2.bf16.msra.mxu0 0
        %843 = vmatprep.subr.bf16.mxu0 0
        %844 = vmatpush2.bf16.msra.mxu0 0
        %845 = vmatprep.subr.bf16.mxu0 0
        %846 = vmatpush2.bf16.msra.mxu0 0
        %847 = vmatprep.mubr.bf16.mxu0 0
        %848 = vmatmul.mubr.bf16.gmra.mxu0 %v810
        %v849 = vpop.f32.mrf.mxu0
        %v850 = vadd.f32 0.0, %v849
        %v851 = vpop.f32.mrf.mxu0
        %v852 = vpop.f32.mrf.mxu0
        %v853 = vpop.f32.mrf.mxu0
        %854 = vdwg.mxu0
        %855 = vrot.lane.b32.xlu0 %v520, 104
        %v856 = vpop.permute.xlu0 %855
        %857 = vrot.lane.b32.xlu0 %v521, 104
        %v858 = vpop.permute.xlu0 %857
        %v860 = vsel %vm523, %v856, 0
        %v863 = vsel %vm523, %v858, 0
        %865 = vmatprep.subr.bf16.mxu0 0
        %866 = vmatpush1.bf16.xpose.msra.mxu0 0
        %867 = vmatprep.subr.bf16.mxu0 0
        %868 = vmatpush1.bf16.xpose.msra.mxu0 0
        %869 = vmatprep.subr.bf16.mxu0 0
        %870 = vmatpush1.bf16.xpose.msra.mxu0 0
        %871 = vmatprep.subr.bf16.mxu0 0
        %872 = vmatpush1.bf16.xpose.msra.mxu0 0
        %873 = vmatprep.subr.bf16.mxu0 0
        %874 = vmatpush1.bf16.xpose.msra.mxu0 0
        %875 = vmatprep.subr.bf16.mxu0 0
        %876 = vmatpush1.bf16.xpose.msra.mxu0 0
        %877 = vmatprep.subr.bf16.mxu0 0
        %878 = vmatpush1.bf16.xpose.msra.mxu0 0
        %879 = vmatprep.subr.bf16.mxu0 0
        %880 = vmatpush1.bf16.xpose.msra.mxu0 %v863
        %881 = vmatprep.subr.bf16.mxu0 0
        %882 = vmatpush2.bf16.xpose.msra.mxu0 0
        %883 = vmatprep.subr.bf16.mxu0 0
        %884 = vmatpush2.bf16.xpose.msra.mxu0 0
        %885 = vmatprep.subr.bf16.mxu0 0
        %886 = vmatpush2.bf16.xpose.msra.mxu0 0
        %887 = vmatprep.subr.bf16.mxu0 0
        %888 = vmatpush2.bf16.xpose.msra.mxu0 0
        %889 = vmatprep.subr.bf16.mxu0 0
        %890 = vmatpush2.bf16.xpose.msra.mxu0 0
        %891 = vmatprep.subr.bf16.mxu0 0
        %892 = vmatpush2.bf16.xpose.msra.mxu0 0
        %893 = vmatprep.subr.bf16.mxu0 0
        %894 = vmatpush2.bf16.xpose.msra.mxu0 0
        %895 = vmatprep.subr.bf16.mxu0 0
        %896 = vmatpush2.bf16.xpose.msra.mxu0 0
        %897 = vmatprep.mubr.bf16.mxu0 0
        %898 = vmatmul.mubr.bf16.gmra.mxu0 %v860
        %v899 = vpop.f32.mrf.mxu0
        %v900 = vadd.f32 0.0, %v899
        %v901 = vpop.f32.mrf.mxu0
        %v902 = vpop.f32.mrf.mxu0
        %v903 = vpop.f32.mrf.mxu0
        %904 = vdwg.mxu0
        %v905 = vmul.f32 %v900, 0.35355338
        %v906 = vsel %vm523, %v905, -inf
        %907 = vmax.xlane.f32.xlu0 %v906
        %v908 = vpop.xlane.xlu0 %907
        %v909 = vsub.f32 %v905, %v908
        %v910 = vmul.f32 %v909, 1.442695
        %v911 = vpow.pop %v910
        %v912 = vsel %vm523, %v911, 0.0
        %913 = vadd.xlane.f32.xlu0 %v912
        %v914 = vpop.xlane.xlu0 %913
        %v915 = vrcp.pop %v914
        %v916 = vmul.f32 %v911, %v915
        %v917 = vpack.c.bf16 %v916, %v916
        %918 = vrot.lane.b32.xlu0 %v522, 104
        %v919 = vpop.permute.xlu0 %918
        %v921 = vsel %vm523, %v917, 0
        %v924 = vsel %vm586, %v919, 0
        %926 = vmatprep.subr.bf16.mxu0 0
        %927 = vmatpush1.bf16.msra.mxu0 0
        %928 = vmatprep.subr.bf16.mxu0 0
        %929 = vmatpush1.bf16.msra.mxu0 0
        %930 = vmatprep.subr.bf16.mxu0 0
        %931 = vmatpush1.bf16.msra.mxu0 0
        %932 = vmatprep.subr.bf16.mxu0 0
        %933 = vmatpush1.bf16.msra.mxu0 0
        %934 = vmatprep.subr.bf16.mxu0 0
        %935 = vmatpush1.bf16.msra.mxu0 0
        %936 = vmatprep.subr.bf16.mxu0 0
        %937 = vmatpush1.bf16.msra.mxu0 0
        %938 = vmatprep.subr.bf16.mxu0 0
        %939 = vmatpush1.bf16.msra.mxu0 0
        %940 = vmatprep.subr.bf16.mxu0 0
        %941 = vmatpush1.bf16.msra.mxu0 %v924
        %942 = vmatprep.subr.bf16.mxu0 0
        %943 = vmatpush2.bf16.msra.mxu0 0
        %944 = vmatprep.subr.bf16.mxu0 0
        %945 = vmatpush2.bf16.msra.mxu0 0
        %946 = vmatprep.subr.bf16.mxu0 0
        %947 = vmatpush2.bf16.msra.mxu0 0
        %948 = vmatprep.subr.bf16.mxu0 0
        %949 = vmatpush2.bf16.msra.mxu0 0
        %950 = vmatprep.subr.bf16.mxu0 0
        %951 = vmatpush2.bf16.msra.mxu0 0
        %952 = vmatprep.subr.bf16.mxu0 0
        %953 = vmatpush2.bf16.msra.mxu0 0
        %954 = vmatprep.subr.bf16.mxu0 0
        %955 = vmatpush2.bf16.msra.mxu0 0
        %956 = vmatprep.subr.bf16.mxu0 0
        %957 = vmatpush2.bf16.msra.mxu0 0
        %958 = vmatprep.mubr.bf16.mxu0 0
        %959 = vmatmul.mubr.bf16.gmra.mxu0 %v921
        %v960 = vpop.f32.mrf.mxu0
        %v961 = vadd.f32 0.0, %v960
        %v962 = vpop.f32.mrf.mxu0
        %v963 = vpop.f32.mrf.mxu0
        %v964 = vpop.f32.mrf.mxu0
        %965 = vdwg.mxu0
        %967 = vrot.lane.b32.xlu0 %v739, 8
        %v968 = vpop.permute.xlu0 %967
        %971 = vrot.lane.b32.xlu0 %v850, 16
        %v972 = vpop.permute.xlu0 %971
        %975 = vrot.lane.b32.xlu0 %v961, 24
        %v976 = vpop.permute.xlu0 %975
        %v978 = vsel %vm523, %v625, %v968
        %v979 = vsel %vm374, %v978, %v972
        %vm980 = vcmask 195584
        %v981 = vsel %vm980, %v979, %v976
        %v982 = vpack.c.bf16 %v981, %v981
        %v983 = vld [vmem:[%s6] sm:$0xf]
        %v984 = vld [vmem:[%s6 + $0x4] sm:$0xf]
        %v985 = vld [vmem:[%s6 + $0x8] sm:$0xf]
        %v986 = vld [vmem:[%s6 + $0xc] sm:$0xf]
        %v991 = vunpack.c.l.b16 %v983
        %v992 = vunpack.c.l.b16 %v984
        %v993 = vunpack.c.l.b16 %v985
        %v994 = vunpack.c.l.b16 %v986
        %v995 = vpack.c.b16 %v992, %v991
        %v996 = vpack.c.b16 %v994, %v993
        %vm999 = vcmask 261120
        %v1001 = vsel %vm999, %v982, 0
        %1003 = vmatprep.subr.bf16.mxu0 0
        %1004 = vmatpush1.bf16.msra.mxu0 0
        %1005 = vmatprep.subr.bf16.mxu0 0
        %1006 = vmatpush1.bf16.msra.mxu0 0
        %1007 = vmatprep.subr.bf16.mxu0 0
        %1008 = vmatpush1.bf16.msra.mxu0 0
        %1009 = vmatprep.subr.bf16.mxu0 0
        %1010 = vmatpush1.bf16.msra.mxu0 0
        %1011 = vmatprep.subr.bf16.mxu0 0
        %1012 = vmatpush1.bf16.msra.mxu0 0
        %1013 = vmatprep.subr.bf16.mxu0 0
        %1014 = vmatpush1.bf16.msra.mxu0 0
        %1015 = vmatprep.subr.bf16.mxu0 0
        %1016 = vmatpush1.bf16.msra.mxu0 %v996
        %1017 = vmatprep.subr.bf16.mxu0 0
        %1018 = vmatpush1.bf16.msra.mxu0 %v995
        %1019 = vmatprep.subr.bf16.mxu0 0
        %1020 = vmatpush2.bf16.msra.mxu0 0
        %1021 = vmatprep.subr.bf16.mxu0 0
        %1022 = vmatpush2.bf16.msra.mxu0 0
        %1023 = vmatprep.subr.bf16.mxu0 0
        %1024 = vmatpush2.bf16.msra.mxu0 0
        %1025 = vmatprep.subr.bf16.mxu0 0
        %1026 = vmatpush2.bf16.msra.mxu0 0
        %1027 = vmatprep.subr.bf16.mxu0 0
        %1028 = vmatpush2.bf16.msra.mxu0 0
        %1029 = vmatprep.subr.bf16.mxu0 0
        %1030 = vmatpush2.bf16.msra.mxu0 0
        %1031 = vmatprep.subr.bf16.mxu0 0
        %1032 = vmatpush2.bf16.msra.mxu0 0
        %1033 = vmatprep.subr.bf16.mxu0 0
        %1034 = vmatpush2.bf16.msra.mxu0 0
        %1035 = vmatprep.mubr.bf16.mxu0 0
        %1036 = vmatmul.mubr.bf16.gmra.mxu0 %v1001
        %v1037 = vpop.f32.mrf.mxu0
        %v1038 = vadd.f32 0.0, %v1037
        %v1039 = vpop.f32.mrf.mxu0
        %v1040 = vpop.f32.mrf.mxu0
        %v1041 = vpop.f32.mrf.mxu0
        %1042 = vdwg.mxu0
        %v1043 = vpack.c.bf16 %v1038, %v1038
        %1045 = vrot.lane.b32.xlu0 %v1043, 16
        %v1046 = vpop.permute.xlu0 %1045
        %v1048 = vsel %vm374, %v363, %v1046
        %v1049 = vld [vmem:[%s7] sm:$0xf]
        %v1050 = vld [vmem:[%s7 + $0x4] sm:$0xf]
        %v1051 = vld [vmem:[%s7 + $0x8] sm:$0xf]
        %v1052 = vld [vmem:[%s7 + $0xc] sm:$0xf]
        %v1053 = vld [vmem:[%s8] sm:$0x1]
        %v1055 = vlaneseq
        %v1056 = vshrl.u32 %v1055, 7
        %v1057 = vsub.s32 0, %v1056
        %v1058 = vrot.slane %v1053, %v1057
        %v1064 = vunpack.c.l.b16 %v1049
        %v1065 = vunpack.c.l.b16 %v1050
        %v1066 = vunpack.c.l.b16 %v1051
        %v1067 = vunpack.c.l.b16 %v1052
        %v1068 = vpack.c.b16 %v1065, %v1064
        %v1069 = vpack.c.b16 %v1067, %v1066
        %v1072 = vsel %vm999, %v1048, 0
        %1074 = vmatprep.subr.bf16.mxu0 0
        %1075 = vmatpush1.bf16.msra.mxu0 0
        %1076 = vmatprep.subr.bf16.mxu0 0
        %1077 = vmatpush1.bf16.msra.mxu0 0
        %1078 = vmatprep.subr.bf16.mxu0 0
        %1079 = vmatpush1.bf16.msra.mxu0 0
        %1080 = vmatprep.subr.bf16.mxu0 0
        %1081 = vmatpush1.bf16.msra.mxu0 0
        %1082 = vmatprep.subr.bf16.mxu0 0
        %1083 = vmatpush1.bf16.msra.mxu0 0
        %1084 = vmatprep.subr.bf16.mxu0 0
        %1085 = vmatpush1.bf16.msra.mxu0 0
        %1086 = vmatprep.subr.bf16.mxu0 0
        %1087 = vmatpush1.bf16.msra.mxu0 %v1069
        %1088 = vmatprep.subr.bf16.mxu0 0
        %1089 = vmatpush1.bf16.msra.mxu0 %v1068
        %1090 = vmatprep.subr.bf16.mxu0 0
        %1091 = vmatpush2.bf16.msra.mxu0 0
        %1092 = vmatprep.subr.bf16.mxu0 0
        %1093 = vmatpush2.bf16.msra.mxu0 0
        %1094 = vmatprep.subr.bf16.mxu0 0
        %1095 = vmatpush2.bf16.msra.mxu0 0
        %1096 = vmatprep.subr.bf16.mxu0 0
        %1097 = vmatpush2.bf16.msra.mxu0 0
        %1098 = vmatprep.subr.bf16.mxu0 0
        %1099 = vmatpush2.bf16.msra.mxu0 0
        %1100 = vmatprep.subr.bf16.mxu0 0
        %1101 = vmatpush2.bf16.msra.mxu0 0
        %1102 = vmatprep.subr.bf16.mxu0 0
        %1103 = vmatpush2.bf16.msra.mxu0 0
        %1104 = vmatprep.subr.bf16.mxu0 0
        %1105 = vmatpush2.bf16.msra.mxu0 0
        %1106 = vmatprep.mubr.bf16.mxu0 0
        %1107 = vmatmul.mubr.bf16.gmra.mxu0 %v1072
        %v1108 = vpop.f32.mrf.mxu0
        %v1109 = vadd.f32 %v1058, %v1108
        %v1110 = vpop.f32.mrf.mxu0
        %v1111 = vpop.f32.mrf.mxu0
        %v1112 = vpop.f32.mrf.mxu0
        %1113 = vdwg.mxu0
        %v1114 = vxor.u32 %v1109, 2147483648
        %v1115 = vmul.f32 %v1114, 1.442695
        %v1116 = vpow.pop %v1115
        %v1117 = vadd.f32 %v1116, 1.0
        %v1118 = vrcp.pop %v1117
        %v1119 = vmul.f32 1.0, %v1118
        %v1120 = vunpack.c.l.bf16 %v363
        %v1121 = vsub.f32 %v1120, %v1038
        %v1122 = vmul.f32 %v1119, %v1121
        %v1123 = vadd.f32 %v1038, %v1122
        %1124 = vst.msk [vmem:[%s349] sm:$0xff] %vm374, %v1123
        %s1125 = sand.u32 %s235, 1
        %s1126 = scalar_lea.sflag [#allocation3], %s1125
        %s1127 = sand.u32 %s235, 1
        %s1128 = smul.addr %s1127, 8
        %s1129 = scalar_lea.vmem [#allocation2], %s1128
        // Predicated region
        $region57: #{tpu_custom_call.1} parent=55 // pred_check
          %p1130 = pneg %p245
        $region58: #{tpu_custom_call.1} parent=55 // pred_check_branch
          %1132 = sbr.rel (%p1130) target = $region60
        $region59: #{tpu_custom_call.1} parent=55 // pred_region
          %s1134 = ssub.s32 128, 128
          %1135 = vsyncadd %s1126, %s1134
          %s1136 = smul.addr %s23, 128
          %s1137 = scalar_lea.hbm %s9, %s1136
          %s1139 = sshll.u32 %s1129, 4
          %s1140 = int_to_ptr.vmem [resolvable:$true] %s1139
          %1142 = dma.vmem_to_hbm [thread:$0]  %s1140, 128, %s1137, %s1126
        $region60: #{tpu_custom_call.1} parent=55 // pred_fallthru
          _
      $region56: #{tpu_custom_call.1} parent=5 // pred_fallthru
        _
      %p1143 = scmp.le.s32.totalorder 2, %s18
      // Predicated region
      $region61: #{tpu_custom_call.1} parent=5 // pred_check
        %p1144 = pneg %p1143
      $region62: #{tpu_custom_call.1} parent=5 // pred_check_branch
        %1146 = sbr.rel (%p1144) target = $region64
      $region63: #{tpu_custom_call.1} parent=5 // pred_region
        %s1147 = ssub.s32 %s18, 2
        // Predicated region
        $region65: #{tpu_custom_call.1} parent=63 // pred_check
          %p1148 = pneg %p251
        $region66: #{tpu_custom_call.1} parent=63 // pred_check_branch
          %1150 = sbr.rel (%p1148) target = $region68
        $region67: #{tpu_custom_call.1} parent=63 // pred_region
          %s1151 = sand.u32 %s236, 1
          %s1152 = scalar_lea.sflag [#allocation3], %s1151
          %s1153 = sand.u32 %s236, 1
          %s1154 = smul.addr %s1153, 8
          %s1155 = scalar_lea.vmem [#allocation2], %s1154
          %1156 = dma.done %s1152, 128
        $region68: #{tpu_custom_call.1} parent=63 // pred_fallthru
          _
      $region64: #{tpu_custom_call.1} parent=5 // pred_fallthru
        _
    $region6: #{tpu_custom_call.1} parent=1 // loop_footer
      %s22 = sadd.s32 1, %s18
    $region7: #{tpu_custom_call.1} parent=1 // loop_footer_branch
      %17 = sbr.rel target = $region3
    $region8: #{tpu_custom_call.1} parent=1 // loop_exit
      _
    %1157 = vsyncpa [#allocation3], 1
    %s1158 = scalar_lea.sflag [#allocation3], 1
    %1159 = vsyncpa %s1158, 1

</llo_original>
